<compile_context>
chip_gen: v7x
topology: tpu7x:2x2x1
jax: 0.10.0
libtpu: 0.0.40
codegen_flags: <defaults>
</compile_context>

<pallas_src>
import jax
import jax.numpy as jnp
from jax.experimental import pallas as pl
from jax.experimental.pallas import tpu as pltpu


def _round_up(n, m):
    return pl.cdiv(n, m) * m


# ----------------------------------------------------------------------------
# Pallas kernel: fused 3-layer MLP + amplitude/phase epilogue, all wavelengths
# per grid step, feature-major (cells on the lane axis).
# ----------------------------------------------------------------------------
def _neural_cells_kernel(lam_ref,                    # (L,)       f32  SMEM (scalar prefetch)
                         x_ref,                      # (1, c, T)  f32
                         w1x_ref, w1lam_ref, b1_ref, # (h, c), (h, 1), (h, 1)  f32
                         w2_ref, b2_ref,             # (h, h) cdt, (h, 1) f32
                         w3_ref, b3_ref,             # (3g, h) cdt, (3g, 1) f32
                         amp_ref, phase_ref):        # (1, g*L, T) f32 each
    L = lam_ref.shape[0]
    g = w3_ref.shape[0] // 3
    cdt = w2_ref.dtype                               # compute dtype for layers 2/3 (bf16 or f32)

    x = x_ref[0]                                     # (c, T), lane-dense
    w1x = w1x_ref[...]
    w1lam = w1lam_ref[...]
    b1 = b1_ref[...]
    w2 = w2_ref[...]
    b2 = b2_ref[...]
    w3 = w3_ref[...]
    b3 = b3_ref[...]

    # Layer 1 base term, shared across all L wavelengths (K = c is tiny -> f32 is free).
    h1_base = jnp.dot(w1x, x, preferred_element_type=jnp.float32)       # (h, T)

    amp_rows, ph_rows = [], []
    for li in range(L):                               # static loop, L known at trace time
        # Wavelength folded in as a rank-1 term (no L x N input replication).
        h1 = jnp.maximum(h1_base + lam_ref[li] * w1lam + b1, 0.0)

        # Layer 2: MXU matmul with f32 accumulation; bias+ReLU+cast fused (one h2 write).
        h2 = jnp.dot(w2, h1.astype(cdt), preferred_element_type=jnp.float32)
        h2 = jnp.maximum(h2 + b2, 0.0).astype(cdt)

        # Layer 3 fused across {a, c1, c2}: single (3g, h) matmul, single sigmoid.
        y = jax.nn.sigmoid(
            jnp.dot(w3, h2, preferred_element_type=jnp.float32) + b3)    # (3g, T)

        # Epilogue: sigmoid => a > 0, so |a e^{i theta}| == a and angle == atan2(...):
        # no complex64 round trip needed.
        amp_rows.append(y[0:g])                                          # (g, T)
        ph_rows.append(jnp.arctan2(2.0 * y[2 * g:3 * g] - 1.0,
                                   2.0 * y[g:2 * g] - 1.0))              # (g, T)

    # Assemble the (g*L, T) output block with rows ordered gi*L + li, i.e. already in the
    # final (b, g, l, h, w) memory order -> single lane-dense store per output.
    amp_ref[0] = jnp.concatenate(
        [amp_rows[li][gi:gi + 1, :] for gi in range(g) for li in range(L)], axis=0)
    phase_ref[0] = jnp.concatenate(
        [ph_rows[li][gi:gi + 1, :] for gi in range(g) for li in range(L)], axis=0)


def _neural_cells_pallas_call(lam, xt, w1x_t, w1lam, b1, w2_t, b2, w3_t, b3,
                              *, g, hidden, tile):
    """lam: (L,) f32; xt: (B, c, HW_pad) f32 (cells on the lane axis).
    Returns amp, phase each of shape (B, g*L, HW_pad) f32 (final memory order)."""
    B, c, hw_pad = xt.shape
    L = lam.shape[0]
    Tn = hw_pad // tile
    gl = g * L

    def fixed(shape):
        # Grid-invariant (full-array) block for weights / biases: block index never
        # changes, so Pallas never re-fetches them after the first step.
        return pl.BlockSpec(shape, lambda bi, ti, lam_ref: (0, 0))

    out_struct = jax.ShapeDtypeStruct((B, gl, hw_pad), jnp.float32)
    out_spec = pl.BlockSpec((1, gl, tile), lambda bi, ti, lam_ref: (bi, 0, ti))

    return pl.pallas_call(
        _neural_cells_kernel,
        out_shape=(out_struct, out_struct),
        grid_spec=pltpu.PrefetchScalarGridSpec(
            num_scalar_prefetch=1,            # normalized wavelength vector -> SMEM
            grid=(B, Tn),
            in_specs=[
                pl.BlockSpec((1, c, tile), lambda bi, ti, lam_ref: (bi, 0, ti)),
                fixed((hidden, c)),            # w1x_t   f32
                fixed((hidden, 1)),            # w1lam   f32
                fixed((hidden, 1)),            # b1
                fixed((hidden, hidden)),       # w2_t    compute dtype
                fixed((hidden, 1)),            # b2
                fixed((3 * g, hidden)),        # w3_t    compute dtype (fused a/c1/c2)
                fixed((3 * g, 1)),             # b3      (fused)
            ],
            out_specs=(out_spec, out_spec),
        ),
        compiler_params=pltpu.CompilerParams(
            dimension_semantics=("parallel", "parallel")),
    )(lam, xt, w1x_t, w1lam, b1, w2_t, b2, w3_t, b3)


# ----------------------------------------------------------------------------
# NeuralCells equivalent (thin JAX glue around the fused Pallas kernel)
# ----------------------------------------------------------------------------
class NeuralCellsPallas:
    def __init__(self, dim_in, dim_out, hidden, param_bounds, key,
                 lane_tile=2048, compute_dtype=jnp.bfloat16):
        assert dim_out % 3 == 0
        assert lane_tile >= 128 and lane_tile % 128 == 0
        self.dim_in = dim_in
        self.dim_out = dim_out
        self.hidden = hidden
        self.param_bounds = param_bounds      # list of [min, max]; last entry = wavelength
        self.g = dim_out // 3
        self.num_params = dim_in - 1
        self.lane_tile = lane_tile
        self.compute_dtype = compute_dtype

        k1, k2, k3, k4, k5, k6 = jax.random.split(key, 6)
        scale = 0.5
        w1 = (scale * jax.random.normal(k1, (dim_in, hidden))).astype(jnp.float32)
        w2 = (scale * jax.random.normal(k2, (hidden, hidden))).astype(jnp.float32)
        w3 = (scale * jax.random.normal(k3, (hidden, dim_out))).astype(jnp.float32)
        b1 = (0.1 * jax.random.normal(k4, (hidden,))).astype(jnp.float32)
        b2 = (0.1 * jax.random.normal(k5, (hidden,))).astype(jnp.float32)
        b3 = (0.1 * jax.random.normal(k6, (dim_out,))).astype(jnp.float32)

        c, g = self.num_params, self.g
        # Feature-major (transposed) weights for the cells-on-lanes kernel.
        self.w1x_t = w1[:c].T                                   # (hidden, c)  f32
        self.w1lam = w1[c:].T                                   # (hidden, 1)  f32
        self.b1 = b1.reshape(hidden, 1)
        self.w2_t = w2.T.astype(compute_dtype)                  # (hidden, hidden)
        self.b2 = b2.reshape(hidden, 1)
        # dim_out layout is (g, 3) with c3 = {a, c1, c2}; fuse the three heads into one
        # (3g, hidden) matrix with rows [a_0..a_{g-1}, c1_0.., c2_0..].
        self.w3_t = jnp.concatenate(
            [w3[:, 0::3].T, w3[:, 1::3].T, w3[:, 2::3].T], axis=0).astype(compute_dtype)
        self.b3 = jnp.concatenate([b3[0::3], b3[1::3], b3[2::3]]).reshape(3 * g, 1)

    # --- normalization helpers (match PyTorch semantics) ---
    def normalize(self, params):
        bs = self.param_bounds[:-1]
        cols = [(params[..., i] - b[0]) / (b[1] - b[0]) for i, b in enumerate(bs)]
        return jnp.stack(cols, axis=-1)

    def normalize_wavelength(self, wavelength):
        bw = self.param_bounds[-1]
        return (wavelength - bw[0]) / (bw[1] - bw[0])

    def __call__(self, params, wavelength, pre_normalized=True, batch_size=None):
        """params: [B, H, W, D]; wavelength: [L].
        Returns (amplitude, phase), each of shape [B, g, L, H, W]."""
        del batch_size  # cell batching is handled by the Pallas grid / lane tiling
        x = jnp.asarray(params, jnp.float32)
        lam = jnp.asarray(wavelength, jnp.float32)
        assert x.ndim == 4 and lam.ndim == 1
        b, h, w, c = x.shape
        assert c == len(self.param_bounds) - 1, "Channel dim inconsistent with param_bounds"
        L = int(lam.shape[0])
        g = self.g

        if not pre_normalized:
            x = self.normalize(x)
            lam = self.normalize_wavelength(lam)

        hw = h * w
        # Lane tile: as large as possible (amortizes the ~0.35 us/step grid overhead and
        # lengthens matmul N), but keep >= 4 grid steps so v7x's 2 TensorCores get work.
        tile = min(self.lane_tile, _round_up(hw, 128))
        while b * pl.cdiv(hw, tile) < 4 and tile > 128:
            tile = max(128, _round_up(tile // 2, 128))
        hw_pad = _round_up(hw, tile)

        # Feature-major input: cells on the lane axis -> (B, c, HW_pad).
        # TODO(synk): if the same params are reused across calls, cache xt to skip this
        #             transpose/pad pass (matters most on v5e's lower HBM bandwidth).
        xt = jnp.transpose(x.reshape(b, hw, c), (0, 2, 1))
        if hw_pad != hw:
            xt = jnp.pad(xt, ((0, 0), (0, 0), (0, hw_pad - hw)))

        amp, phase = _neural_cells_pallas_call(
            lam, xt,
            self.w1x_t, self.w1lam, self.b1,
            self.w2_t, self.b2, self.w3_t, self.b3,
            g=g, hidden=self.hidden, tile=tile)

        # (B, g*L, HW_pad) is already in final (b, g, l, h, w) memory order: reshape only
        # (a slice is needed only when HW had to be padded to the lane tile).
        amp = amp.reshape(b, g, L, hw_pad)
        phase = phase.reshape(b, g, L, hw_pad)
        if hw_pad != hw:
            amp = amp[..., :hw]
            phase = phase[..., :hw]
        return amp.reshape(b, g, L, h, w), phase.reshape(b, g, L, h, w)


# ----------------------------------------------------------------------------
# Pure-JAX reference (same math as the kernel, using the model's compute dtype)
# ----------------------------------------------------------------------------
def _reference_forward(model, params, wavelength, pre_normalized=True):
    x = jnp.asarray(params, jnp.float32)
    lam = jnp.asarray(wavelength, jnp.float32)
    b, h, w, c = x.shape
    L = lam.shape[0]
    g = model.g
    cdt = model.w2_t.dtype
    if not pre_normalized:
        x = model.normalize(x)
        lam = model.normalize_wavelength(lam)
    xt = x.reshape(b * h * w, c).T                               # (c, N)
    h1_base = jnp.dot(model.w1x_t, xt, preferred_element_type=jnp.float32)
    amps, phases = [], []
    for li in range(L):
        h1 = jnp.maximum(h1_base + lam[li] * model.w1lam + model.b1, 0.0)
        h2 = jnp.dot(model.w2_t, h1.astype(cdt), preferred_element_type=jnp.float32)
        h2 = jnp.maximum(h2 + model.b2, 0.0).astype(cdt)
        y = jax.nn.sigmoid(
            jnp.dot(model.w3_t, h2, preferred_element_type=jnp.float32) + model.b3)
        amps.append(y[0:g])                                      # (g, N)
        phases.append(jnp.arctan2(2.0 * y[2 * g:3 * g] - 1.0, 2.0 * y[g:2 * g] - 1.0))
    amp = jnp.stack(amps, 0).reshape(L, g, b, h, w).transpose(2, 1, 0, 3, 4)
    phase = jnp.stack(phases, 0).reshape(L, g, b, h, w).transpose(2, 1, 0, 3, 4)
    return amp, phase


if __name__ == "__main__":
    key = jax.random.PRNGKey(0)
    kp, kl, kw = jax.random.split(key, 3)

    # Small shapes: B=2, H=W=16 spatial, D=3 design params, L=3 wavelengths,
    # hidden=64, g=2 polarizations -> dim_in=4, dim_out=6.
    B, H, W, D, L = 2, 16, 16, 3, 3
    hidden, g = 64, 2
    param_bounds = [[60e-9, 300e-9], [60e-9, 300e-9], [60e-9, 300e-9], [310e-9, 750e-9]]

    # pre-normalized inputs in [0, 1]
    params = jax.random.uniform(kp, (B, H, W, D), dtype=jnp.float32)
    wavelength = jax.random.uniform(kl, (L,), dtype=jnp.float32)

    # --- bf16-MXU kernel vs. a reference with the identical dtype flow -------------
    model = NeuralCellsPallas(dim_in=D + 1, dim_out=g * 3, hidden=hidden,
                              param_bounds=param_bounds, key=kw,
                              lane_tile=2048, compute_dtype=jnp.bfloat16)
    amp, phase = model(params, wavelength, pre_normalized=True)
    amp = jax.block_until_ready(amp)
    phase = jax.block_until_ready(phase)
    assert amp.shape == (B, g, L, H, W) and phase.shape == (B, g, L, H, W)

    ref_amp, ref_phase = _reference_forward(model, params, wavelength)
    assert jnp.allclose(amp, ref_amp, atol=1e-4, rtol=1e-4), \
        float(jnp.max(jnp.abs(amp - ref_amp)))
    dphi = jnp.abs((phase - ref_phase + jnp.pi) % (2.0 * jnp.pi) - jnp.pi)
    assert float(jnp.max(dphi)) < 5e-3, float(jnp.max(dphi))

    # --- pure-f32 variant of the same kernel vs. a pure-f32 reference --------------
    # (validates the kernel structure independently of the bf16 casts; bf16 accuracy vs
    #  a real f32 checkpoint must be quantified with the actual trained weights — use
    #  compute_dtype=jnp.float32 as the exact fallback if needed.)
    model_f32 = NeuralCellsPallas(dim_in=D + 1, dim_out=g * 3, hidden=hidden,
                                  param_bounds=param_bounds, key=kw,
                                  lane_tile=2048, compute_dtype=jnp.float32)
    amp32, phase32 = model_f32(params, wavelength, pre_normalized=True)
    amp32 = jax.block_until_ready(amp32)
    phase32 = jax.block_until_ready(phase32)
    ref_amp32, ref_phase32 = _reference_forward(model_f32, params, wavelength)
    assert jnp.allclose(amp32, ref_amp32, atol=1e-3, rtol=1e-3), \
        float(jnp.max(jnp.abs(amp32 - ref_amp32)))
    dphi32 = jnp.abs((phase32 - ref_phase32 + jnp.pi) % (2.0 * jnp.pi) - jnp.pi)
    assert float(jnp.max(dphi32)) < 2e-2, float(jnp.max(dphi32))

    print("KERNEL_OK")
</pallas_src>

<mosaic_0001>
module attributes {stable_mosaic.version = 11 : i64} {
  func.func @_neural_cells_kernel(%arg0: i32, %arg1: i32, %arg2: memref<3xf32, #tpu.memory_space<smem>>, %arg3: memref<1x3x128xf32, #tpu.memory_space<vmem>>, %arg4: memref<64x3xf32, #tpu.memory_space<vmem>>, %arg5: memref<64x1xf32, #tpu.memory_space<vmem>>, %arg6: memref<64x1xf32, #tpu.memory_space<vmem>>, %arg7: memref<64x64xbf16, #tpu.memory_space<vmem>>, %arg8: memref<64x1xf32, #tpu.memory_space<vmem>>, %arg9: memref<6x64xbf16, #tpu.memory_space<vmem>>, %arg10: memref<6x1xf32, #tpu.memory_space<vmem>>, %arg11: memref<1x6x128xf32, #tpu.memory_space<vmem>>, %arg12: memref<1x6x128xf32, #tpu.memory_space<vmem>>) attributes {dimension_semantics = [#tpu.dimension_semantics<parallel>, #tpu.dimension_semantics<parallel>], iteration_bounds = array<i64: 2, 2>, scalar_prefetch = 1 : i64, scratch_operands = 0 : i64, tpu.core_type = #tpu.core_type<tc>, window_params = [{transform_indices = @transform_0, window_bounds = array<i64: 1, 3, 128>}, {pipeline_mode = #tpu.pipeline_mode<synchronous>, transform_indices = @transform_1, window_bounds = array<i64: 64, 3>}, {pipeline_mode = #tpu.pipeline_mode<synchronous>, transform_indices = @transform_2, window_bounds = array<i64: 64, 1>}, {pipeline_mode = #tpu.pipeline_mode<synchronous>, transform_indices = @transform_3, window_bounds = array<i64: 64, 1>}, {pipeline_mode = #tpu.pipeline_mode<synchronous>, transform_indices = @transform_4, window_bounds = array<i64: 64, 64>}, {pipeline_mode = #tpu.pipeline_mode<synchronous>, transform_indices = @transform_5, window_bounds = array<i64: 64, 1>}, {pipeline_mode = #tpu.pipeline_mode<synchronous>, transform_indices = @transform_6, window_bounds = array<i64: 6, 64>}, {pipeline_mode = #tpu.pipeline_mode<synchronous>, transform_indices = @transform_7, window_bounds = array<i64: 6, 1>}, {transform_indices = @transform_8, window_bounds = array<i64: 1, 6, 128>}, {transform_indices = @transform_9, window_bounds = array<i64: 1, 6, 128>}]} {
    %c0 = arith.constant 0 : index
    %c0_0 = arith.constant 0 : index
    %c0_1 = arith.constant 0 : index
    %0 = vector.load %arg3[%c0, %c0_0, %c0_1] : memref<1x3x128xf32, #tpu.memory_space<vmem>>, vector<1x3x128xf32>
    %1 = vector.shape_cast %0 : vector<1x3x128xf32> to vector<3x128xf32>
    %c0_2 = arith.constant 0 : index
    %c0_3 = arith.constant 0 : index
    %2 = vector.load %arg4[%c0_2, %c0_3] : memref<64x3xf32, #tpu.memory_space<vmem>>, vector<64x3xf32>
    %c0_4 = arith.constant 0 : index
    %c0_5 = arith.constant 0 : index
    %3 = vector.load %arg5[%c0_4, %c0_5] : memref<64x1xf32, #tpu.memory_space<vmem>>, vector<64x1xf32>
    %c0_6 = arith.constant 0 : index
    %c0_7 = arith.constant 0 : index
    %4 = vector.load %arg6[%c0_6, %c0_7] : memref<64x1xf32, #tpu.memory_space<vmem>>, vector<64x1xf32>
    %c0_8 = arith.constant 0 : index
    %c0_9 = arith.constant 0 : index
    %5 = vector.load %arg7[%c0_8, %c0_9] : memref<64x64xbf16, #tpu.memory_space<vmem>>, vector<64x64xbf16>
    %c0_10 = arith.constant 0 : index
    %c0_11 = arith.constant 0 : index
    %6 = vector.load %arg8[%c0_10, %c0_11] : memref<64x1xf32, #tpu.memory_space<vmem>>, vector<64x1xf32>
    %c0_12 = arith.constant 0 : index
    %c0_13 = arith.constant 0 : index
    %7 = vector.load %arg9[%c0_12, %c0_13] : memref<6x64xbf16, #tpu.memory_space<vmem>>, vector<6x64xbf16>
    %c0_14 = arith.constant 0 : index
    %c0_15 = arith.constant 0 : index
    %8 = vector.load %arg10[%c0_14, %c0_15] : memref<6x1xf32, #tpu.memory_space<vmem>>, vector<6x1xf32>
    %cst = arith.constant dense<0.000000e+00> : vector<64x128xf32>
    %9 = tpu.matmul %2, %1, %cst {dimension_numbers = #tpu.dot_dimension_numbers<[1], [0], [0], [1], [0, 0, 1, 1], [], []>} : vector<64x3xf32>, vector<3x128xf32>, vector<64x128xf32> -> vector<64x128xf32>
    %c0_16 = arith.constant 0 : index
    %10 = memref.load %arg2[%c0_16] : memref<3xf32, #tpu.memory_space<smem>>
    %11 = vector.broadcast %10 : f32 to vector<64x1xf32>
    %12 = arith.mulf %11, %3 : vector<64x1xf32>
    %13 = vector.broadcast %12 : vector<64x1xf32> to vector<64x128xf32>
    %14 = arith.addf %9, %13 : vector<64x128xf32>
    %15 = vector.broadcast %4 : vector<64x1xf32> to vector<64x128xf32>
    %16 = arith.addf %14, %15 : vector<64x128xf32>
    %cst_17 = arith.constant 0.000000e+00 : f32
    %17 = vector.broadcast %cst_17 : f32 to vector<64x128xf32>
    %18 = arith.maximumf %16, %17 : vector<64x128xf32>
    %19 = arith.truncf %18 : vector<64x128xf32> to vector<64x128xbf16>
    %cst_18 = arith.constant dense<0.000000e+00> : vector<64x128xf32>
    %20 = tpu.matmul %5, %19, %cst_18 {dimension_numbers = #tpu.dot_dimension_numbers<[1], [0], [0], [1], [0, 0, 1, 1], [], []>} : vector<64x64xbf16>, vector<64x128xbf16>, vector<64x128xf32> -> vector<64x128xf32>
    %21 = vector.broadcast %6 : vector<64x1xf32> to vector<64x128xf32>
    %22 = arith.addf %20, %21 : vector<64x128xf32>
    %cst_19 = arith.constant 0.000000e+00 : f32
    %23 = vector.broadcast %cst_19 : f32 to vector<64x128xf32>
    %24 = arith.maximumf %22, %23 : vector<64x128xf32>
    %25 = arith.truncf %24 : vector<64x128xf32> to vector<64x128xbf16>
    %cst_20 = arith.constant dense<0.000000e+00> : vector<6x128xf32>
    %26 = tpu.matmul %7, %25, %cst_20 {dimension_numbers = #tpu.dot_dimension_numbers<[1], [0], [0], [1], [0, 0, 1, 1], [], []>} : vector<6x64xbf16>, vector<64x128xbf16>, vector<6x128xf32> -> vector<6x128xf32>
    %27 = vector.broadcast %8 : vector<6x1xf32> to vector<6x128xf32>
    %28 = arith.addf %26, %27 : vector<6x128xf32>
    %29 = arith.negf %28 : vector<6x128xf32>
    %30 = math.exp %29 : vector<6x128xf32>
    %cst_21 = arith.constant 1.000000e+00 : f32
    %31 = vector.broadcast %cst_21 : f32 to vector<6x128xf32>
    %32 = arith.addf %31, %30 : vector<6x128xf32>
    %33 = arith.divf %31, %32 : vector<6x128xf32>
    %34 = vector.extract_strided_slice %33 {offsets = [0, 0], sizes = [2, 128], strides = [1, 1]} : vector<6x128xf32> to vector<2x128xf32>
    %35 = vector.extract_strided_slice %33 {offsets = [4, 0], sizes = [2, 128], strides = [1, 1]} : vector<6x128xf32> to vector<2x128xf32>
    %cst_22 = arith.constant 2.000000e+00 : f32
    %36 = vector.broadcast %cst_22 : f32 to vector<2x128xf32>
    %37 = arith.mulf %36, %35 : vector<2x128xf32>
    %cst_23 = arith.constant 1.000000e+00 : f32
    %38 = vector.broadcast %cst_23 : f32 to vector<2x128xf32>
    %39 = arith.subf %37, %38 : vector<2x128xf32>
    %40 = vector.extract_strided_slice %33 {offsets = [2, 0], sizes = [2, 128], strides = [1, 1]} : vector<6x128xf32> to vector<2x128xf32>
    %cst_24 = arith.constant 2.000000e+00 : f32
    %41 = vector.broadcast %cst_24 : f32 to vector<2x128xf32>
    %42 = arith.mulf %41, %40 : vector<2x128xf32>
    %cst_25 = arith.constant 1.000000e+00 : f32
    %43 = vector.broadcast %cst_25 : f32 to vector<2x128xf32>
    %44 = arith.subf %42, %43 : vector<2x128xf32>
    %45 = math.atan2 %39, %44 : vector<2x128xf32>
    %c1 = arith.constant 1 : index
    %46 = memref.load %arg2[%c1] : memref<3xf32, #tpu.memory_space<smem>>
    %47 = vector.broadcast %46 : f32 to vector<64x1xf32>
    %48 = arith.mulf %47, %3 : vector<64x1xf32>
    %49 = vector.broadcast %48 : vector<64x1xf32> to vector<64x128xf32>
    %50 = arith.addf %9, %49 : vector<64x128xf32>
    %51 = vector.broadcast %4 : vector<64x1xf32> to vector<64x128xf32>
    %52 = arith.addf %50, %51 : vector<64x128xf32>
    %cst_26 = arith.constant 0.000000e+00 : f32
    %53 = vector.broadcast %cst_26 : f32 to vector<64x128xf32>
    %54 = arith.maximumf %52, %53 : vector<64x128xf32>
    %55 = arith.truncf %54 : vector<64x128xf32> to vector<64x128xbf16>
    %cst_27 = arith.constant dense<0.000000e+00> : vector<64x128xf32>
    %56 = tpu.matmul %5, %55, %cst_27 {dimension_numbers = #tpu.dot_dimension_numbers<[1], [0], [0], [1], [0, 0, 1, 1], [], []>} : vector<64x64xbf16>, vector<64x128xbf16>, vector<64x128xf32> -> vector<64x128xf32>
    %57 = vector.broadcast %6 : vector<64x1xf32> to vector<64x128xf32>
    %58 = arith.addf %56, %57 : vector<64x128xf32>
    %cst_28 = arith.constant 0.000000e+00 : f32
    %59 = vector.broadcast %cst_28 : f32 to vector<64x128xf32>
    %60 = arith.maximumf %58, %59 : vector<64x128xf32>
    %61 = arith.truncf %60 : vector<64x128xf32> to vector<64x128xbf16>
    %cst_29 = arith.constant dense<0.000000e+00> : vector<6x128xf32>
    %62 = tpu.matmul %7, %61, %cst_29 {dimension_numbers = #tpu.dot_dimension_numbers<[1], [0], [0], [1], [0, 0, 1, 1], [], []>} : vector<6x64xbf16>, vector<64x128xbf16>, vector<6x128xf32> -> vector<6x128xf32>
    %63 = vector.broadcast %8 : vector<6x1xf32> to vector<6x128xf32>
    %64 = arith.addf %62, %63 : vector<6x128xf32>
    %65 = arith.negf %64 : vector<6x128xf32>
    %66 = math.exp %65 : vector<6x128xf32>
    %cst_30 = arith.constant 1.000000e+00 : f32
    %67 = vector.broadcast %cst_30 : f32 to vector<6x128xf32>
    %68 = arith.addf %67, %66 : vector<6x128xf32>
    %69 = arith.divf %67, %68 : vector<6x128xf32>
    %70 = vector.extract_strided_slice %69 {offsets = [0, 0], sizes = [2, 128], strides = [1, 1]} : vector<6x128xf32> to vector<2x128xf32>
    %71 = vector.extract_strided_slice %69 {offsets = [4, 0], sizes = [2, 128], strides = [1, 1]} : vector<6x128xf32> to vector<2x128xf32>
    %cst_31 = arith.constant 2.000000e+00 : f32
    %72 = vector.broadcast %cst_31 : f32 to vector<2x128xf32>
    %73 = arith.mulf %72, %71 : vector<2x128xf32>
    %cst_32 = arith.constant 1.000000e+00 : f32
    %74 = vector.broadcast %cst_32 : f32 to vector<2x128xf32>
    %75 = arith.subf %73, %74 : vector<2x128xf32>
    %76 = vector.extract_strided_slice %69 {offsets = [2, 0], sizes = [2, 128], strides = [1, 1]} : vector<6x128xf32> to vector<2x128xf32>
    %cst_33 = arith.constant 2.000000e+00 : f32
    %77 = vector.broadcast %cst_33 : f32 to vector<2x128xf32>
    %78 = arith.mulf %77, %76 : vector<2x128xf32>
    %cst_34 = arith.constant 1.000000e+00 : f32
    %79 = vector.broadcast %cst_34 : f32 to vector<2x128xf32>
    %80 = arith.subf %78, %79 : vector<2x128xf32>
    %81 = math.atan2 %75, %80 : vector<2x128xf32>
    %c2 = arith.constant 2 : index
    %82 = memref.load %arg2[%c2] : memref<3xf32, #tpu.memory_space<smem>>
    %83 = vector.broadcast %82 : f32 to vector<64x1xf32>
    %84 = arith.mulf %83, %3 : vector<64x1xf32>
    %85 = vector.broadcast %84 : vector<64x1xf32> to vector<64x128xf32>
    %86 = arith.addf %9, %85 : vector<64x128xf32>
    %87 = vector.broadcast %4 : vector<64x1xf32> to vector<64x128xf32>
    %88 = arith.addf %86, %87 : vector<64x128xf32>
    %cst_35 = arith.constant 0.000000e+00 : f32
    %89 = vector.broadcast %cst_35 : f32 to vector<64x128xf32>
    %90 = arith.maximumf %88, %89 : vector<64x128xf32>
    %91 = arith.truncf %90 : vector<64x128xf32> to vector<64x128xbf16>
    %cst_36 = arith.constant dense<0.000000e+00> : vector<64x128xf32>
    %92 = tpu.matmul %5, %91, %cst_36 {dimension_numbers = #tpu.dot_dimension_numbers<[1], [0], [0], [1], [0, 0, 1, 1], [], []>} : vector<64x64xbf16>, vector<64x128xbf16>, vector<64x128xf32> -> vector<64x128xf32>
    %93 = vector.broadcast %6 : vector<64x1xf32> to vector<64x128xf32>
    %94 = arith.addf %92, %93 : vector<64x128xf32>
    %cst_37 = arith.constant 0.000000e+00 : f32
    %95 = vector.broadcast %cst_37 : f32 to vector<64x128xf32>
    %96 = arith.maximumf %94, %95 : vector<64x128xf32>
    %97 = arith.truncf %96 : vector<64x128xf32> to vector<64x128xbf16>
    %cst_38 = arith.constant dense<0.000000e+00> : vector<6x128xf32>
    %98 = tpu.matmul %7, %97, %cst_38 {dimension_numbers = #tpu.dot_dimension_numbers<[1], [0], [0], [1], [0, 0, 1, 1], [], []>} : vector<6x64xbf16>, vector<64x128xbf16>, vector<6x128xf32> -> vector<6x128xf32>
    %99 = vector.broadcast %8 : vector<6x1xf32> to vector<6x128xf32>
    %100 = arith.addf %98, %99 : vector<6x128xf32>
    %101 = arith.negf %100 : vector<6x128xf32>
    %102 = math.exp %101 : vector<6x128xf32>
    %cst_39 = arith.constant 1.000000e+00 : f32
    %103 = vector.broadcast %cst_39 : f32 to vector<6x128xf32>
    %104 = arith.addf %103, %102 : vector<6x128xf32>
    %105 = arith.divf %103, %104 : vector<6x128xf32>
    %106 = vector.extract_strided_slice %105 {offsets = [0, 0], sizes = [2, 128], strides = [1, 1]} : vector<6x128xf32> to vector<2x128xf32>
    %107 = vector.extract_strided_slice %105 {offsets = [4, 0], sizes = [2, 128], strides = [1, 1]} : vector<6x128xf32> to vector<2x128xf32>
    %cst_40 = arith.constant 2.000000e+00 : f32
    %108 = vector.broadcast %cst_40 : f32 to vector<2x128xf32>
    %109 = arith.mulf %108, %107 : vector<2x128xf32>
    %cst_41 = arith.constant 1.000000e+00 : f32
    %110 = vector.broadcast %cst_41 : f32 to vector<2x128xf32>
    %111 = arith.subf %109, %110 : vector<2x128xf32>
    %112 = vector.extract_strided_slice %105 {offsets = [2, 0], sizes = [2, 128], strides = [1, 1]} : vector<6x128xf32> to vector<2x128xf32>
    %cst_42 = arith.constant 2.000000e+00 : f32
    %113 = vector.broadcast %cst_42 : f32 to vector<2x128xf32>
    %114 = arith.mulf %113, %112 : vector<2x128xf32>
    %cst_43 = arith.constant 1.000000e+00 : f32
    %115 = vector.broadcast %cst_43 : f32 to vector<2x128xf32>
    %116 = arith.subf %114, %115 : vector<2x128xf32>
    %117 = math.atan2 %111, %116 : vector<2x128xf32>
    %118 = vector.extract_strided_slice %34 {offsets = [0, 0], sizes = [1, 128], strides = [1, 1]} : vector<2x128xf32> to vector<1x128xf32>
    %119 = vector.extract_strided_slice %70 {offsets = [0, 0], sizes = [1, 128], strides = [1, 1]} : vector<2x128xf32> to vector<1x128xf32>
    %120 = vector.extract_strided_slice %106 {offsets = [0, 0], sizes = [1, 128], strides = [1, 1]} : vector<2x128xf32> to vector<1x128xf32>
    %121 = vector.extract_strided_slice %34 {offsets = [1, 0], sizes = [1, 128], strides = [1, 1]} : vector<2x128xf32> to vector<1x128xf32>
    %122 = vector.extract_strided_slice %70 {offsets = [1, 0], sizes = [1, 128], strides = [1, 1]} : vector<2x128xf32> to vector<1x128xf32>
    %123 = vector.extract_strided_slice %106 {offsets = [1, 0], sizes = [1, 128], strides = [1, 1]} : vector<2x128xf32> to vector<1x128xf32>
    %124 = tpu.concatenate %118, %119, %120, %121, %122, %123 in 0 : vector<1x128xf32>, vector<1x128xf32>, vector<1x128xf32>, vector<1x128xf32>, vector<1x128xf32>, vector<1x128xf32> -> vector<6x128xf32>
    %c0_44 = arith.constant 0 : index
    %c0_45 = arith.constant 0 : index
    %c0_46 = arith.constant 0 : index
    %125 = vector.load %arg11[%c0_44, %c0_45, %c0_46] : memref<1x6x128xf32, #tpu.memory_space<vmem>>, vector<1x6x128xf32>
    %126 = vector.shape_cast %125 : vector<1x6x128xf32> to vector<6x128xf32>
    %127 = vector.shape_cast %124 : vector<6x128xf32> to vector<1x6x128xf32>
    tpu.vector_store %arg11[%c0_44, %c0_45, %c0_46], %127 {strides = array<i32>} : memref<1x6x128xf32, #tpu.memory_space<vmem>>, vector<1x6x128xf32>,
    %128 = vector.extract_strided_slice %45 {offsets = [0, 0], sizes = [1, 128], strides = [1, 1]} : vector<2x128xf32> to vector<1x128xf32>
    %129 = vector.extract_strided_slice %81 {offsets = [0, 0], sizes = [1, 128], strides = [1, 1]} : vector<2x128xf32> to vector<1x128xf32>
    %130 = vector.extract_strided_slice %117 {offsets = [0, 0], sizes = [1, 128], strides = [1, 1]} : vector<2x128xf32> to vector<1x128xf32>
    %131 = vector.extract_strided_slice %45 {offsets = [1, 0], sizes = [1, 128], strides = [1, 1]} : vector<2x128xf32> to vector<1x128xf32>
    %132 = vector.extract_strided_slice %81 {offsets = [1, 0], sizes = [1, 128], strides = [1, 1]} : vector<2x128xf32> to vector<1x128xf32>
    %133 = vector.extract_strided_slice %117 {offsets = [1, 0], sizes = [1, 128], strides = [1, 1]} : vector<2x128xf32> to vector<1x128xf32>
    %134 = tpu.concatenate %128, %129, %130, %131, %132, %133 in 0 : vector<1x128xf32>, vector<1x128xf32>, vector<1x128xf32>, vector<1x128xf32>, vector<1x128xf32>, vector<1x128xf32> -> vector<6x128xf32>
    %c0_47 = arith.constant 0 : index
    %c0_48 = arith.constant 0 : index
    %c0_49 = arith.constant 0 : index
    %135 = vector.load %arg12[%c0_47, %c0_48, %c0_49] : memref<1x6x128xf32, #tpu.memory_space<vmem>>, vector<1x6x128xf32>
    %136 = vector.shape_cast %135 : vector<1x6x128xf32> to vector<6x128xf32>
    %137 = vector.shape_cast %134 : vector<6x128xf32> to vector<1x6x128xf32>
    tpu.vector_store %arg12[%c0_47, %c0_48, %c0_49], %137 {strides = array<i32>} : memref<1x6x128xf32, #tpu.memory_space<vmem>>, vector<1x6x128xf32>,
    return
  }
  func.func @transform_0(%arg0: i32, %arg1: i32, %arg2: memref<3xf32, #tpu.memory_space<smem>>) -> (i32, i32, i32) {
    %c0_i32 = arith.constant 0 : i32
    %c0_i32_0 = arith.constant 0 : i32
    return %arg0, %c0_i32, %arg1 : i32, i32, i32
  }
  func.func @transform_1(%arg0: i32, %arg1: i32, %arg2: memref<3xf32, #tpu.memory_space<smem>>) -> (i32, i32) {
    %c0_i32 = arith.constant 0 : i32
    %c0_i32_0 = arith.constant 0 : i32
    %c0_i32_1 = arith.constant 0 : i32
    return %c0_i32, %c0_i32_0 : i32, i32
  }
  func.func @transform_2(%arg0: i32, %arg1: i32, %arg2: memref<3xf32, #tpu.memory_space<smem>>) -> (i32, i32) {
    %c0_i32 = arith.constant 0 : i32
    %c0_i32_0 = arith.constant 0 : i32
    %c0_i32_1 = arith.constant 0 : i32
    return %c0_i32, %c0_i32_0 : i32, i32
  }
  func.func @transform_3(%arg0: i32, %arg1: i32, %arg2: memref<3xf32, #tpu.memory_space<smem>>) -> (i32, i32) {
    %c0_i32 = arith.constant 0 : i32
    %c0_i32_0 = arith.constant 0 : i32
    %c0_i32_1 = arith.constant 0 : i32
    return %c0_i32, %c0_i32_0 : i32, i32
  }
  func.func @transform_4(%arg0: i32, %arg1: i32, %arg2: memref<3xf32, #tpu.memory_space<smem>>) -> (i32, i32) {
    %c0_i32 = arith.constant 0 : i32
    %c0_i32_0 = arith.constant 0 : i32
    %c0_i32_1 = arith.constant 0 : i32
    return %c0_i32, %c0_i32_0 : i32, i32
  }
  func.func @transform_5(%arg0: i32, %arg1: i32, %arg2: memref<3xf32, #tpu.memory_space<smem>>) -> (i32, i32) {
    %c0_i32 = arith.constant 0 : i32
    %c0_i32_0 = arith.constant 0 : i32
    %c0_i32_1 = arith.constant 0 : i32
    return %c0_i32, %c0_i32_0 : i32, i32
  }
  func.func @transform_6(%arg0: i32, %arg1: i32, %arg2: memref<3xf32, #tpu.memory_space<smem>>) -> (i32, i32) {
    %c0_i32 = arith.constant 0 : i32
    %c0_i32_0 = arith.constant 0 : i32
    %c0_i32_1 = arith.constant 0 : i32
    return %c0_i32, %c0_i32_0 : i32, i32
  }
  func.func @transform_7(%arg0: i32, %arg1: i32, %arg2: memref<3xf32, #tpu.memory_space<smem>>) -> (i32, i32) {
    %c0_i32 = arith.constant 0 : i32
    %c0_i32_0 = arith.constant 0 : i32
    %c0_i32_1 = arith.constant 0 : i32
    return %c0_i32, %c0_i32_0 : i32, i32
  }
  func.func @transform_8(%arg0: i32, %arg1: i32, %arg2: memref<3xf32, #tpu.memory_space<smem>>) -> (i32, i32, i32) {
    %c0_i32 = arith.constant 0 : i32
    %c0_i32_0 = arith.constant 0 : i32
    return %arg0, %c0_i32, %arg1 : i32, i32, i32
  }
  func.func @transform_9(%arg0: i32, %arg1: i32, %arg2: memref<3xf32, #tpu.memory_space<smem>>) -> (i32, i32, i32) {
    %c0_i32 = arith.constant 0 : i32
    %c0_i32_0 = arith.constant 0 : i32
    return %arg0, %c0_i32, %arg1 : i32, i32, i32
  }
}

</mosaic_0001>

<llo_original>
// kernel: tpu_custom_call.1
$region0: #{tpu_custom_call.1}
  #allocation0 [shape = 'u32[]', space=smem, size = 0x4, offset = 0x4, fixed_abs, tag = 'smem constant byte address 0x4 - core index']
  #allocation1 [shape = 'u32[144,128]{1,0:T(1,128)}', space=vmem, size = 0x12000, scoped, tag = 'internal scratch']
  #allocation2 [shape = 's32[1]{0}', space=sflag, size = 0x4, scoped, tag = 'scoped memory for tpu_custom_call.1']
  #allocation3 [shape = 'u8[512]{0}', space=smem, size = 0x200, scoped, tag = 'prefetched SMEM operand 0']
  %s0 = inlined_call_operand.vmem [shape: f32[3], index: 0, kind: input, shape index: {}]
  %s1 = inlined_call_operand.vmem [shape: f32[2,3,256], index: 1, kind: input, shape index: {}]
  %s2 = inlined_call_operand.vmem [shape: f32[64,3], index: 2, kind: input, shape index: {}]
  %s3 = inlined_call_operand.vmem [shape: f32[64,1], index: 3, kind: input, shape index: {}]
  %s4 = inlined_call_operand.vmem [shape: f32[64,1], index: 4, kind: input, shape index: {}]
  %s5 = inlined_call_operand.vmem [shape: bf16[64,64], index: 5, kind: input, shape index: {}]
  %s6 = inlined_call_operand.vmem [shape: f32[64,1], index: 6, kind: input, shape index: {}]
  %s7 = inlined_call_operand.vmem [shape: bf16[6,64], index: 7, kind: input, shape index: {}]
  %s8 = inlined_call_operand.vmem [shape: f32[6,1], index: 8, kind: input, shape index: {}]
  %s9 = inlined_call_operand.vmem [shape: f32[2,6,256], index: 9, kind: output, shape index: {0}]
  %s10 = inlined_call_operand.vmem [shape: f32[2,6,256], index: 10, kind: output, shape index: {1}]
  %11 = xla_tuple %s9, %s10
  %s12 = sld [smem:[#allocation0]]
  $region73: #{tpu_custom_call.1} parent=0
    _
  %s14 = ssub.s32 1, %s12
  %s15 = scalar_select 0, %s14, %s12
  %s16 = sshll.u32 %s0, 4
  %s17 = int_to_ptr.vmem [resolvable:$true] %s16
  %19 = dma.vmem_to_smem %s17, 16, [#allocation3], [#allocation2]
  %20 = dma.done [#allocation2], 16
  %21 = sfence
  loop: start=0, step=1, limit=6
  $region2: #{tpu_custom_call.1} parent=0 // loop_pre_header
    _
  $region3: #{tpu_custom_call.1} parent=0 // loop_header
    %s23 = sphi 0, %s27
    %p24 = scmp.ge.s32.totalorder %s23, 6
    %s30 = sphi 0, %s42
    %s31 = sphi 0, %s38
    %s32 = sphi 0, %s30
    %s33 = sphi 0, %s31
    %s34 = sphi 0, %s32
    %s35 = sphi 0, %s33
    %s47 = sphi 0, %s49
    %s50 = sphi 0, %s47
    %s51 = sphi 0, %s50
    %s67 = sphi 0, %s51
    %s71 = sphi 0, %s71
    %s73 = sphi 0, %s71
    %s74 = sphi 0, %s73
    %s88 = sphi 0, %s74
    %s92 = sphi 0, %s92
    %s94 = sphi 0, %s92
    %s95 = sphi 0, %s94
    %s109 = sphi 0, %s95
    %s113 = sphi 0, %s113
    %s115 = sphi 0, %s113
    %s116 = sphi 0, %s115
    %s130 = sphi 0, %s116
    %s134 = sphi 0, %s134
    %s136 = sphi 0, %s134
    %s137 = sphi 0, %s136
    %s151 = sphi 0, %s137
    %s155 = sphi 0, %s155
    %s157 = sphi 0, %s155
    %s158 = sphi 0, %s157
    %s172 = sphi 0, %s158
    %s176 = sphi 0, %s176
    %s178 = sphi 0, %s176
    %s179 = sphi 0, %s178
    %s193 = sphi 0, %s179
    %s197 = sphi 0, %s197
    %s199 = sphi 0, %s197
    %s200 = sphi 0, %s199
    %s214 = sphi 0, %s200
    %s222 = sphi 0, %s224
    %s225 = sphi 0, %s222
    %s226 = sphi 0, %s225
    %s242 = sphi 0, %s226
    %s250 = sphi 0, %s252
    %s253 = sphi 0, %s250
    %s254 = sphi 0, %s253
    %s270 = sphi 0, %s254
  $region4: #{tpu_custom_call.1} parent=0 // loop_header_branch
    %26 = sbr.rel (%p24) target = $region8
  $region5: #{tpu_custom_call.1} parent=0 // loop_body
    %s28 = ssub.s32 %s23, 1
    %s29 = ssub.s32 %s23, 2
    %s36 = sadd.s32 1, %s31
    %p37 = scmp.ge.s32.totalorder %s36, 2
    %s38 = scalar_select %p37, 0, %s36
    %s39 = sadd.s32 1, %s30
    %s40 = scalar_select %p37, %s39, %s30
    %p41 = scmp.ge.s32.totalorder %s40, 2
    %s42 = scalar_select %p41, 0, %s40
    %s43 = ssub.s32 %s30, %s42
    %s44 = ssub.s32 %s31, %s38
    %s45 = sor.u32 %s43, %s44
    %p46 = scmp.eq.s32.totalorder %s45, 0
    %s48 = sadd.s32 %s47, 1
    %s49 = scalar_select %p46, %s47, %s48
    %p52 = pneg %p46
    %p53 = scmp.eq.s32.totalorder %s23, 3
    %p54 = por %p52, %p53
    %p55 = scmp.ne.s32.totalorder %s47, %s50
    %p56 = scmp.eq.s32.totalorder %s23, 0
    %p57 = por %p55, %p56
    %p58 = scmp.ne.s32.totalorder %s47, %s50
    %p59 = scmp.eq.s32.totalorder %s28, 3
    %p60 = por %p58, %p59
    %p61 = scmp.ne.s32.totalorder %s50, %s51
    %p62 = scmp.eq.s32.totalorder %s28, 0
    %p63 = por %p61, %p62
    %p64 = scmp.ne.s32.totalorder %s50, %s51
    %p65 = scmp.eq.s32.totalorder %s29, 3
    %p66 = por %p64, %p65
    %p68 = scmp.ne.s32.totalorder %s51, %s67
    %p69 = scmp.eq.s32.totalorder %s29, 0
    %p70 = por %p68, %p69
    %s72 = sadd.s32 %s71, 1
    %p75 = scmp.eq.s32.totalorder %s23, 3
    %p76 = scmp.ne.s32.totalorder %s71, %s73
    %p77 = scmp.eq.s32.totalorder %s23, 0
    %p78 = por %p76, %p77
    %p79 = scmp.ne.s32.totalorder %s71, %s73
    %p80 = scmp.eq.s32.totalorder %s28, 3
    %p81 = por %p79, %p80
    %p82 = scmp.ne.s32.totalorder %s73, %s74
    %p83 = scmp.eq.s32.totalorder %s28, 0
    %p84 = por %p82, %p83
    %p85 = scmp.ne.s32.totalorder %s73, %s74
    %p86 = scmp.eq.s32.totalorder %s29, 3
    %p87 = por %p85, %p86
    %p89 = scmp.ne.s32.totalorder %s74, %s88
    %p90 = scmp.eq.s32.totalorder %s29, 0
    %p91 = por %p89, %p90
    %s93 = sadd.s32 %s92, 1
    %p96 = scmp.eq.s32.totalorder %s23, 3
    %p97 = scmp.ne.s32.totalorder %s92, %s94
    %p98 = scmp.eq.s32.totalorder %s23, 0
    %p99 = por %p97, %p98
    %p100 = scmp.ne.s32.totalorder %s92, %s94
    %p101 = scmp.eq.s32.totalorder %s28, 3
    %p102 = por %p100, %p101
    %p103 = scmp.ne.s32.totalorder %s94, %s95
    %p104 = scmp.eq.s32.totalorder %s28, 0
    %p105 = por %p103, %p104
    %p106 = scmp.ne.s32.totalorder %s94, %s95
    %p107 = scmp.eq.s32.totalorder %s29, 3
    %p108 = por %p106, %p107
    %p110 = scmp.ne.s32.totalorder %s95, %s109
    %p111 = scmp.eq.s32.totalorder %s29, 0
    %p112 = por %p110, %p111
    %s114 = sadd.s32 %s113, 1
    %p117 = scmp.eq.s32.totalorder %s23, 3
    %p118 = scmp.ne.s32.totalorder %s113, %s115
    %p119 = scmp.eq.s32.totalorder %s23, 0
    %p120 = por %p118, %p119
    %p121 = scmp.ne.s32.totalorder %s113, %s115
    %p122 = scmp.eq.s32.totalorder %s28, 3
    %p123 = por %p121, %p122
    %p124 = scmp.ne.s32.totalorder %s115, %s116
    %p125 = scmp.eq.s32.totalorder %s28, 0
    %p126 = por %p124, %p125
    %p127 = scmp.ne.s32.totalorder %s115, %s116
    %p128 = scmp.eq.s32.totalorder %s29, 3
    %p129 = por %p127, %p128
    %p131 = scmp.ne.s32.totalorder %s116, %s130
    %p132 = scmp.eq.s32.totalorder %s29, 0
    %p133 = por %p131, %p132
    %s135 = sadd.s32 %s134, 1
    %p138 = scmp.eq.s32.totalorder %s23, 3
    %p139 = scmp.ne.s32.totalorder %s134, %s136
    %p140 = scmp.eq.s32.totalorder %s23, 0
    %p141 = por %p139, %p140
    %p142 = scmp.ne.s32.totalorder %s134, %s136
    %p143 = scmp.eq.s32.totalorder %s28, 3
    %p144 = por %p142, %p143
    %p145 = scmp.ne.s32.totalorder %s136, %s137
    %p146 = scmp.eq.s32.totalorder %s28, 0
    %p147 = por %p145, %p146
    %p148 = scmp.ne.s32.totalorder %s136, %s137
    %p149 = scmp.eq.s32.totalorder %s29, 3
    %p150 = por %p148, %p149
    %p152 = scmp.ne.s32.totalorder %s137, %s151
    %p153 = scmp.eq.s32.totalorder %s29, 0
    %p154 = por %p152, %p153
    %s156 = sadd.s32 %s155, 1
    %p159 = scmp.eq.s32.totalorder %s23, 3
    %p160 = scmp.ne.s32.totalorder %s155, %s157
    %p161 = scmp.eq.s32.totalorder %s23, 0
    %p162 = por %p160, %p161
    %p163 = scmp.ne.s32.totalorder %s155, %s157
    %p164 = scmp.eq.s32.totalorder %s28, 3
    %p165 = por %p163, %p164
    %p166 = scmp.ne.s32.totalorder %s157, %s158
    %p167 = scmp.eq.s32.totalorder %s28, 0
    %p168 = por %p166, %p167
    %p169 = scmp.ne.s32.totalorder %s157, %s158
    %p170 = scmp.eq.s32.totalorder %s29, 3
    %p171 = por %p169, %p170
    %p173 = scmp.ne.s32.totalorder %s158, %s172
    %p174 = scmp.eq.s32.totalorder %s29, 0
    %p175 = por %p173, %p174
    %s177 = sadd.s32 %s176, 1
    %p180 = scmp.eq.s32.totalorder %s23, 3
    %p181 = scmp.ne.s32.totalorder %s176, %s178
    %p182 = scmp.eq.s32.totalorder %s23, 0
    %p183 = por %p181, %p182
    %p184 = scmp.ne.s32.totalorder %s176, %s178
    %p185 = scmp.eq.s32.totalorder %s28, 3
    %p186 = por %p184, %p185
    %p187 = scmp.ne.s32.totalorder %s178, %s179
    %p188 = scmp.eq.s32.totalorder %s28, 0
    %p189 = por %p187, %p188
    %p190 = scmp.ne.s32.totalorder %s178, %s179
    %p191 = scmp.eq.s32.totalorder %s29, 3
    %p192 = por %p190, %p191
    %p194 = scmp.ne.s32.totalorder %s179, %s193
    %p195 = scmp.eq.s32.totalorder %s29, 0
    %p196 = por %p194, %p195
    %s198 = sadd.s32 %s197, 1
    %p201 = scmp.eq.s32.totalorder %s23, 3
    %p202 = scmp.ne.s32.totalorder %s197, %s199
    %p203 = scmp.eq.s32.totalorder %s23, 0
    %p204 = por %p202, %p203
    %p205 = scmp.ne.s32.totalorder %s197, %s199
    %p206 = scmp.eq.s32.totalorder %s28, 3
    %p207 = por %p205, %p206
    %p208 = scmp.ne.s32.totalorder %s199, %s200
    %p209 = scmp.eq.s32.totalorder %s28, 0
    %p210 = por %p208, %p209
    %p211 = scmp.ne.s32.totalorder %s199, %s200
    %p212 = scmp.eq.s32.totalorder %s29, 3
    %p213 = por %p211, %p212
    %p215 = scmp.ne.s32.totalorder %s200, %s214
    %p216 = scmp.eq.s32.totalorder %s29, 0
    %p217 = por %p215, %p216
    %s218 = ssub.s32 %s30, %s42
    %s219 = ssub.s32 %s31, %s38
    %s220 = sor.u32 %s218, %s219
    %p221 = scmp.eq.s32.totalorder %s220, 0
    %s223 = sadd.s32 %s222, 1
    %s224 = scalar_select %p221, %s222, %s223
    %p227 = pneg %p221
    %p228 = scmp.eq.s32.totalorder %s23, 3
    %p229 = por %p227, %p228
    %p230 = scmp.ne.s32.totalorder %s222, %s225
    %p231 = scmp.eq.s32.totalorder %s23, 0
    %p232 = por %p230, %p231
    %p233 = scmp.ne.s32.totalorder %s222, %s225
    %p234 = scmp.eq.s32.totalorder %s28, 3
    %p235 = por %p233, %p234
    %p236 = scmp.ne.s32.totalorder %s225, %s226
    %p237 = scmp.eq.s32.totalorder %s28, 0
    %p238 = por %p236, %p237
    %p239 = scmp.ne.s32.totalorder %s225, %s226
    %p240 = scmp.eq.s32.totalorder %s29, 3
    %p241 = por %p239, %p240
    %p243 = scmp.ne.s32.totalorder %s226, %s242
    %p244 = scmp.eq.s32.totalorder %s29, 0
    %p245 = por %p243, %p244
    %s246 = ssub.s32 %s30, %s42
    %s247 = ssub.s32 %s31, %s38
    %s248 = sor.u32 %s246, %s247
    %p249 = scmp.eq.s32.totalorder %s248, 0
    %s251 = sadd.s32 %s250, 1
    %s252 = scalar_select %p249, %s250, %s251
    %p255 = pneg %p249
    %p256 = scmp.eq.s32.totalorder %s23, 3
    %p257 = por %p255, %p256
    %p258 = scmp.ne.s32.totalorder %s250, %s253
    %p259 = scmp.eq.s32.totalorder %s23, 0
    %p260 = por %p258, %p259
    %p261 = scmp.ne.s32.totalorder %s250, %s253
    %p262 = scmp.eq.s32.totalorder %s28, 3
    %p263 = por %p261, %p262
    %p264 = scmp.ne.s32.totalorder %s253, %s254
    %p265 = scmp.eq.s32.totalorder %s28, 0
    %p266 = por %p264, %p265
    %p267 = scmp.ne.s32.totalorder %s253, %s254
    %p268 = scmp.eq.s32.totalorder %s29, 3
    %p269 = por %p267, %p268
    %p271 = scmp.ne.s32.totalorder %s254, %s270
    %p272 = scmp.eq.s32.totalorder %s29, 0
    %p273 = por %p271, %p272
    %p274 = scmp.le.s32.totalorder 1, %s23
    %p275 = scmp.lt.s32.totalorder %s23, 5
    %p276 = pnand %p274, %p275
    %p277 = pneg %p276
    // Predicated region
    $region9: #{tpu_custom_call.1} parent=5 // pred_check
      _
    $region10: #{tpu_custom_call.1} parent=5 // pred_check_branch
      %279 = sbr.rel (%p276) target = $region12
    $region11: #{tpu_custom_call.1} parent=5 // pred_region
      %s280 = ssub.s32 %s23, 1
      // Predicated region
      $region13: #{tpu_custom_call.1} parent=11 // pred_check
        %p281 = pneg %p84
      $region14: #{tpu_custom_call.1} parent=11 // pred_check_branch
        %283 = sbr.rel (%p281) target = $region16
      $region15: #{tpu_custom_call.1} parent=11 // pred_region
        _
      $region16: #{tpu_custom_call.1} parent=11 // pred_fallthru
        _
      // Predicated region
      $region17: #{tpu_custom_call.1} parent=11 // pred_check
        %p284 = pneg %p105
      $region18: #{tpu_custom_call.1} parent=11 // pred_check_branch
        %286 = sbr.rel (%p284) target = $region20
      $region19: #{tpu_custom_call.1} parent=11 // pred_region
        _
      $region20: #{tpu_custom_call.1} parent=11 // pred_fallthru
        _
      // Predicated region
      $region21: #{tpu_custom_call.1} parent=11 // pred_check
        %p287 = pneg %p126
      $region22: #{tpu_custom_call.1} parent=11 // pred_check_branch
        %289 = sbr.rel (%p287) target = $region24
      $region23: #{tpu_custom_call.1} parent=11 // pred_region
        _
      $region24: #{tpu_custom_call.1} parent=11 // pred_fallthru
        _
      // Predicated region
      $region25: #{tpu_custom_call.1} parent=11 // pred_check
        %p290 = pneg %p147
      $region26: #{tpu_custom_call.1} parent=11 // pred_check_branch
        %292 = sbr.rel (%p290) target = $region28
      $region27: #{tpu_custom_call.1} parent=11 // pred_region
        _
      $region28: #{tpu_custom_call.1} parent=11 // pred_fallthru
        _
      // Predicated region
      $region29: #{tpu_custom_call.1} parent=11 // pred_check
        %p293 = pneg %p168
      $region30: #{tpu_custom_call.1} parent=11 // pred_check_branch
        %295 = sbr.rel (%p293) target = $region32
      $region31: #{tpu_custom_call.1} parent=11 // pred_region
        _
      $region32: #{tpu_custom_call.1} parent=11 // pred_fallthru
        _
      // Predicated region
      $region33: #{tpu_custom_call.1} parent=11 // pred_check
        %p296 = pneg %p189
      $region34: #{tpu_custom_call.1} parent=11 // pred_check_branch
        %298 = sbr.rel (%p296) target = $region36
      $region35: #{tpu_custom_call.1} parent=11 // pred_region
        _
      $region36: #{tpu_custom_call.1} parent=11 // pred_fallthru
        _
      // Predicated region
      $region37: #{tpu_custom_call.1} parent=11 // pred_check
        %p299 = pneg %p210
      $region38: #{tpu_custom_call.1} parent=11 // pred_check_branch
        %301 = sbr.rel (%p299) target = $region40
      $region39: #{tpu_custom_call.1} parent=11 // pred_region
        _
      $region40: #{tpu_custom_call.1} parent=11 // pred_fallthru
        _
    $region12: #{tpu_custom_call.1} parent=5 // pred_fallthru
      _
    %p302 = scmp.lt.s32.totalorder %s23, 4
    // Predicated region
    $region41: #{tpu_custom_call.1} parent=5 // pred_check
      %p303 = pneg %p302
    $region42: #{tpu_custom_call.1} parent=5 // pred_check_branch
      %305 = sbr.rel (%p303) target = $region44
    $region43: #{tpu_custom_call.1} parent=5 // pred_region
      // Predicated region
      $region45: #{tpu_custom_call.1} parent=43 // pred_check
        %p306 = pneg %p57
      $region46: #{tpu_custom_call.1} parent=43 // pred_check_branch
        %308 = sbr.rel (%p306) target = $region48
      $region47: #{tpu_custom_call.1} parent=43 // pred_region
        %p309 = scmp.lt.s32.totalorder %s30, 1
        %s310 = scalar_select %p309, %s30, 1
        %p311 = scmp.lt.s32.totalorder %s31, 1
        %s312 = scalar_select %p311, %s31, 1
        %s313 = smul.addr %s310, 2
        %s314 = sadd.s32 %s312, %s313
        %s315 = smul.addr %s314, 4
        %s316 = scalar_lea.vmem %s1, %s315
      $region48: #{tpu_custom_call.1} parent=43 // pred_fallthru
        _
    $region44: #{tpu_custom_call.1} parent=5 // pred_fallthru
      _
    %p317 = scmp.le.s32.totalorder 1, %s23
    %p318 = scmp.lt.s32.totalorder %s23, 5
    %p319 = pnand %p317, %p318
    %p320 = pneg %p319
    // Predicated region
    $region49: #{tpu_custom_call.1} parent=5 // pred_check
      _
    $region50: #{tpu_custom_call.1} parent=5 // pred_check_branch
      %322 = sbr.rel (%p319) target = $region52
    $region51: #{tpu_custom_call.1} parent=5 // pred_region
      %s323 = ssub.s32 %s23, 1
      %p324 = scmp.lt.s32.totalorder %s32, 1
      %s325 = scalar_select %p324, %s32, 1
      %p326 = scmp.lt.s32.totalorder %s33, 1
      %s327 = scalar_select %p326, %s33, 1
      %s328 = smul.addr %s325, 2
      %s329 = sadd.s32 %s327, %s328
      %s330 = smul.addr %s329, 4
      %s331 = scalar_lea.vmem %s1, %s330
      %p332 = pneg %p63
      %p333 = pneg %p60
      %p334 = pneg %p84
      %p335 = pneg %p81
      %p336 = pneg %p105
      %p337 = pneg %p102
      %p338 = pneg %p126
      %p339 = pneg %p123
      %p340 = pneg %p147
      %p341 = pneg %p144
      %p342 = pneg %p168
      %p343 = pneg %p165
      %p344 = pneg %p189
      %p345 = pneg %p186
      %p346 = pneg %p210
      %p347 = pneg %p207
      %p348 = pneg %p238
      %p349 = pneg %p235
      %p350 = scmp.lt.s32.totalorder %s32, 1
      %s351 = scalar_select %p350, %s32, 1
      %p352 = scmp.lt.s32.totalorder %s33, 1
      %s353 = scalar_select %p352, %s33, 1
      %s354 = smul.addr %s351, 2
      %s355 = sadd.s32 %s353, %s354
      %s356 = smul.addr %s355, 8
      %s357 = scalar_lea.vmem %s9, %s356
      %p358 = pneg %p266
      %p359 = pneg %p263
      %p360 = scmp.lt.s32.totalorder %s32, 1
      %s361 = scalar_select %p360, %s32, 1
      %p362 = scmp.lt.s32.totalorder %s33, 1
      %s363 = scalar_select %p362, %s33, 1
      %s364 = smul.addr %s361, 2
      %s365 = sadd.s32 %s363, %s364
      %s366 = smul.addr %s365, 8
      %s367 = scalar_lea.vmem %s10, %s366
      %p368 = scmp.lt.s32.totalorder %s32, 1
      %s369 = scalar_select %p368, %s32, 1
      %p370 = scmp.lt.s32.totalorder %s33, 1
      %s371 = scalar_select %p370, %s33, 1
      %s372 = smul.addr %s369, 2
      %s373 = sadd.s32 %s371, %s372
      %s374 = smul.addr %s373, 4
      %s375 = scalar_lea.vmem %s1, %s374
      %p376 = scmp.lt.s32.totalorder %s32, 1
      %s377 = scalar_select %p376, %s32, 1
      %p378 = scmp.lt.s32.totalorder %s33, 1
      %s379 = scalar_select %p378, %s33, 1
      %s380 = smul.addr %s377, 2
      %s381 = sadd.s32 %s379, %s380
      %s382 = smul.addr %s381, 8
      %s383 = scalar_lea.vmem %s9, %s382
      %p384 = scmp.lt.s32.totalorder %s32, 1
      %s385 = scalar_select %p384, %s32, 1
      %p386 = scmp.lt.s32.totalorder %s33, 1
      %s387 = scalar_select %p386, %s33, 1
      %s388 = smul.addr %s385, 2
      %s389 = sadd.s32 %s387, %s388
      %s390 = smul.addr %s389, 8
      %s391 = scalar_lea.vmem %s10, %s390
      %v393 = vld [vmem:[%s375] sm:$0x7]
      %v394 = vld [vmem:[%s2] sm:$0xff]
      %v395 = vld [vmem:[%s2 + $0x8] sm:$0xff]
      %v396 = vld [vmem:[%s2 + $0x10] sm:$0xff]
      %v397 = vld [vmem:[%s2 + $0x18] sm:$0xff]
      %v398 = vld [vmem:[%s2 + $0x20] sm:$0xff]
      %v399 = vld [vmem:[%s2 + $0x28] sm:$0xff]
      %v400 = vld [vmem:[%s2 + $0x30] sm:$0xff]
      %v401 = vld [vmem:[%s2 + $0x38] sm:$0xff]
      %v402 = vld [vmem:[%s3] sm:$0xff]
      %v403 = vld [vmem:[%s3 + $0x8] sm:$0xff]
      %v404 = vld [vmem:[%s3 + $0x10] sm:$0xff]
      %v405 = vld [vmem:[%s3 + $0x18] sm:$0xff]
      %v406 = vld [vmem:[%s3 + $0x20] sm:$0xff]
      %v407 = vld [vmem:[%s3 + $0x28] sm:$0xff]
      %v408 = vld [vmem:[%s3 + $0x30] sm:$0xff]
      %v409 = vld [vmem:[%s3 + $0x38] sm:$0xff]
      %v410 = vld [vmem:[%s4] sm:$0xff]
      %v411 = vld [vmem:[%s4 + $0x8] sm:$0xff]
      %v412 = vld [vmem:[%s4 + $0x10] sm:$0xff]
      %v413 = vld [vmem:[%s4 + $0x18] sm:$0xff]
      %v414 = vld [vmem:[%s4 + $0x20] sm:$0xff]
      %v415 = vld [vmem:[%s4 + $0x28] sm:$0xff]
      %v416 = vld [vmem:[%s4 + $0x30] sm:$0xff]
      %v417 = vld [vmem:[%s4 + $0x38] sm:$0xff]
      %v418 = vld [vmem:[%s5] sm:$0xf]
      %v419 = vld [vmem:[%s5 + $0x4] sm:$0xf]
      %v420 = vld [vmem:[%s5 + $0x8] sm:$0xf]
      %v421 = vld [vmem:[%s5 + $0xc] sm:$0xf]
      %v422 = vld [vmem:[%s5 + $0x10] sm:$0xf]
      %v423 = vld [vmem:[%s5 + $0x14] sm:$0xf]
      %v424 = vld [vmem:[%s5 + $0x18] sm:$0xf]
      %v425 = vld [vmem:[%s5 + $0x1c] sm:$0xf]
      %v426 = vld [vmem:[%s6] sm:$0xff]
      %v427 = vld [vmem:[%s6 + $0x8] sm:$0xff]
      %v428 = vld [vmem:[%s6 + $0x10] sm:$0xff]
      %v429 = vld [vmem:[%s6 + $0x18] sm:$0xff]
      %v430 = vld [vmem:[%s6 + $0x20] sm:$0xff]
      %v431 = vld [vmem:[%s6 + $0x28] sm:$0xff]
      %v432 = vld [vmem:[%s6 + $0x30] sm:$0xff]
      %v433 = vld [vmem:[%s6 + $0x38] sm:$0xff]
      %v434 = vld [vmem:[%s7] sm:$0x7]
      %v435 = vld [vmem:[%s8] sm:$0x3f]
      %vm436 = vcmask 23552
      %v438 = vsel %vm436, %v394, 0
      %v441 = vsel %vm436, %v395, 0
      %v444 = vsel %vm436, %v396, 0
      %v447 = vsel %vm436, %v397, 0
      %v450 = vsel %vm436, %v398, 0
      %v453 = vsel %vm436, %v399, 0
      %v456 = vsel %vm436, %v400, 0
      %v459 = vsel %vm436, %v401, 0
      %vm461 = vcmask 1042432
      %v463 = vsel %vm461, %v393, 0
      %465 = vmatprep.subr.mxu0 0.0
      %466 = vmatpush1.msra.mxu0 %v463
      %467 = vmatprep.subr.mxu0 0.0
      %468 = vmatpush1.msra.mxu0 0.0
      %469 = vmatprep.subr.mxu0 0.0
      %470 = vmatpush1.msra.mxu0 0.0
      %471 = vmatprep.subr.mxu0 0.0
      %472 = vmatpush1.msra.mxu0 0.0
      %473 = vmatprep.subr.mxu0 0.0
      %474 = vmatpush1.msra.mxu0 0.0
      %475 = vmatprep.subr.mxu0 0.0
      %476 = vmatpush1.msra.mxu0 0.0
      %477 = vmatprep.subr.mxu0 0.0
      %478 = vmatpush1.msra.mxu0 0.0
      %479 = vmatprep.subr.mxu0 0.0
      %480 = vmatpush1.msra.mxu0 0.0
      %481 = vmatprep.subr.mxu0 0.0
      %482 = vmatpush1.msra.mxu0 0.0
      %483 = vmatprep.subr.mxu0 0.0
      %484 = vmatpush1.msra.mxu0 0.0
      %485 = vmatprep.subr.mxu0 0.0
      %486 = vmatpush1.msra.mxu0 0.0
      %487 = vmatprep.subr.mxu0 0.0
      %488 = vmatpush1.msra.mxu0 0.0
      %489 = vmatprep.subr.mxu0 0.0
      %490 = vmatpush1.msra.mxu0 0.0
      %491 = vmatprep.subr.mxu0 0.0
      %492 = vmatpush1.msra.mxu0 0.0
      %493 = vmatprep.subr.mxu0 0.0
      %494 = vmatpush1.msra.mxu0 0.0
      %495 = vmatprep.subr.mxu0 0.0
      %496 = vmatpush1.msra.mxu0 0.0
      %497 = vmatprep.subr.mxu0 0.0
      %498 = vmatpush1.msra.mxu0 0.0
      %499 = vmatprep.subr.mxu0 0.0
      %500 = vmatpush1.msra.mxu0 0.0
      %501 = vmatprep.subr.mxu0 0.0
      %502 = vmatpush1.msra.mxu0 0.0
      %503 = vmatprep.subr.mxu0 0.0
      %504 = vmatpush1.msra.mxu0 0.0
      %505 = vmatprep.subr.mxu0 0.0
      %506 = vmatpush1.msra.mxu0 0.0
      %507 = vmatprep.subr.mxu0 0.0
      %508 = vmatpush1.msra.mxu0 0.0
      %509 = vmatprep.subr.mxu0 0.0
      %510 = vmatpush1.msra.mxu0 0.0
      %511 = vmatprep.subr.mxu0 0.0
      %512 = vmatpush1.msra.mxu0 0.0
      %513 = vmatprep.subr.mxu0 0.0
      %514 = vmatpush1.msra.mxu0 0.0
      %515 = vmatprep.subr.mxu0 0.0
      %516 = vmatpush1.msra.mxu0 0.0
      %517 = vmatprep.subr.mxu0 0.0
      %518 = vmatpush1.msra.mxu0 0.0
      %519 = vmatprep.subr.mxu0 0.0
      %520 = vmatpush1.msra.mxu0 0.0
      %521 = vmatprep.subr.mxu0 0.0
      %522 = vmatpush1.msra.mxu0 0.0
      %523 = vmatprep.subr.mxu0 0.0
      %524 = vmatpush1.msra.mxu0 0.0
      %525 = vmatprep.subr.mxu0 0.0
      %526 = vmatpush1.msra.mxu0 0.0
      %527 = vmatprep.subr.mxu0 0.0
      %528 = vmatpush1.msra.mxu0 0.0
      %529 = vmatprep.mubr.f32.mxu0 0.0
      %530 = vmatmul.mubr.f32.gmra.mrb[0].mxu0 %v438
      %v531 = vpop.f32.mrb[0].mxu0
      %v532 = vadd.f32 0.0, %v531
      %v533 = vpop.f32.mrb[0].mxu0
      %534 = vmatprep.mubr.f32.mxu0 0.0
      %535 = vmatmul.mubr.f32.gmra.mrb[0].mxu0 %v441
      %v536 = vpop.f32.mrb[0].mxu0
      %v537 = vadd.f32 0.0, %v536
      %v538 = vpop.f32.mrb[0].mxu0
      %539 = vmatprep.mubr.f32.mxu0 0.0
      %540 = vmatmul.mubr.f32.gmra.mrb[0].mxu0 %v444
      %v541 = vpop.f32.mrb[0].mxu0
      %v542 = vadd.f32 0.0, %v541
      %v543 = vpop.f32.mrb[0].mxu0
      %544 = vmatprep.mubr.f32.mxu0 0.0
      %545 = vmatmul.mubr.f32.gmra.mrb[0].mxu0 %v447
      %v546 = vpop.f32.mrb[0].mxu0
      %v547 = vadd.f32 0.0, %v546
      %v548 = vpop.f32.mrb[0].mxu0
      %549 = vmatprep.mubr.f32.mxu0 0.0
      %550 = vmatmul.mubr.f32.gmra.mrb[0].mxu0 %v450
      %v551 = vpop.f32.mrb[0].mxu0
      %v552 = vadd.f32 0.0, %v551
      %v553 = vpop.f32.mrb[0].mxu0
      %554 = vmatprep.mubr.f32.mxu0 0.0
      %555 = vmatmul.mubr.f32.gmra.mrb[0].mxu0 %v453
      %v556 = vpop.f32.mrb[0].mxu0
      %v557 = vadd.f32 0.0, %v556
      %v558 = vpop.f32.mrb[0].mxu0
      %559 = vmatprep.mubr.f32.mxu0 0.0
      %560 = vmatmul.mubr.f32.gmra.mrb[0].mxu0 %v456
      %v561 = vpop.f32.mrb[0].mxu0
      %v562 = vadd.f32 0.0, %v561
      %v563 = vpop.f32.mrb[0].mxu0
      %564 = vmatprep.mubr.f32.mxu0 0.0
      %565 = vmatmul.mubr.f32.gmra.mrb[0].mxu0 %v459
      %v566 = vpop.f32.mrb[0].mxu0
      %v567 = vadd.f32 0.0, %v566
      %v568 = vpop.f32.mrb[0].mxu0
      %569 = vdwg.mxu0
      %s570 = sld [smem:[#allocation3]]
      %v571 = vstv %s570
      %v572 = vmul.f32 %v571, %v402
      %v573 = vmul.f32 %v571, %v403
      %v574 = vmul.f32 %v571, %v404
      %v575 = vmul.f32 %v571, %v405
      %v576 = vmul.f32 %v571, %v406
      %v577 = vmul.f32 %v571, %v407
      %v578 = vmul.f32 %v571, %v408
      %v579 = vmul.f32 %v571, %v409
      %581 = vset.pattern.permute.xlu0 0
      %582 = vperm.xlu0 %581, %v572
      %v583 = vpop.permute.xlu0 %582
      %586 = vset.pattern.permute.xlu0 0
      %587 = vperm.xlu0 %586, %v573
      %v588 = vpop.permute.xlu0 %587
      %591 = vset.pattern.permute.xlu0 0
      %592 = vperm.xlu0 %591, %v574
      %v593 = vpop.permute.xlu0 %592
      %596 = vset.pattern.permute.xlu0 0
      %597 = vperm.xlu0 %596, %v575
      %v598 = vpop.permute.xlu0 %597
      %601 = vset.pattern.permute.xlu0 0
      %602 = vperm.xlu0 %601, %v576
      %v603 = vpop.permute.xlu0 %602
      %606 = vset.pattern.permute.xlu0 0
      %607 = vperm.xlu0 %606, %v577
      %v608 = vpop.permute.xlu0 %607
      %611 = vset.pattern.permute.xlu0 0
      %612 = vperm.xlu0 %611, %v578
      %v613 = vpop.permute.xlu0 %612
      %616 = vset.pattern.permute.xlu0 0
      %617 = vperm.xlu0 %616, %v579
      %v618 = vpop.permute.xlu0 %617
      %v620 = vadd.f32 %v532, %v583
      %v621 = vadd.f32 %v537, %v588
      %v622 = vadd.f32 %v542, %v593
      %v623 = vadd.f32 %v547, %v598
      %v624 = vadd.f32 %v552, %v603
      %v625 = vadd.f32 %v557, %v608
      %v626 = vadd.f32 %v562, %v613
      %v627 = vadd.f32 %v567, %v618
      %629 = vset.pattern.permute.xlu0 0
      %630 = vperm.xlu0 %629, %v410
      %v631 = vpop.permute.xlu0 %630
      %634 = vset.pattern.permute.xlu0 0
      %635 = vperm.xlu0 %634, %v411
      %v636 = vpop.permute.xlu0 %635
      %639 = vset.pattern.permute.xlu0 0
      %640 = vperm.xlu0 %639, %v412
      %v641 = vpop.permute.xlu0 %640
      %644 = vset.pattern.permute.xlu0 0
      %645 = vperm.xlu0 %644, %v413
      %v646 = vpop.permute.xlu0 %645
      %649 = vset.pattern.permute.xlu0 0
      %650 = vperm.xlu0 %649, %v414
      %v651 = vpop.permute.xlu0 %650
      %654 = vset.pattern.permute.xlu0 0
      %655 = vperm.xlu0 %654, %v415
      %v656 = vpop.permute.xlu0 %655
      %659 = vset.pattern.permute.xlu0 0
      %660 = vperm.xlu0 %659, %v416
      %v661 = vpop.permute.xlu0 %660
      %664 = vset.pattern.permute.xlu0 0
      %665 = vperm.xlu0 %664, %v417
      %v666 = vpop.permute.xlu0 %665
      %v668 = vadd.f32 %v620, %v631
      %v669 = vadd.f32 %v621, %v636
      %v670 = vadd.f32 %v622, %v641
      %v671 = vadd.f32 %v623, %v646
      %v672 = vadd.f32 %v624, %v651
      %v673 = vadd.f32 %v625, %v656
      %v674 = vadd.f32 %v626, %v661
      %v675 = vadd.f32 %v627, %v666
      %v676 = vmax.f32 %v668, 0.0
      %v677 = vmax.f32 %v669, 0.0
      %v678 = vmax.f32 %v670, 0.0
      %v679 = vmax.f32 %v671, 0.0
      %v680 = vmax.f32 %v672, 0.0
      %v681 = vmax.f32 %v673, 0.0
      %v682 = vmax.f32 %v674, 0.0
      %v683 = vmax.f32 %v675, 0.0
      %v684 = vpack.c.bf16 %v677, %v676
      %v685 = vpack.c.bf16 %v679, %v678
      %v686 = vpack.c.bf16 %v681, %v680
      %v687 = vpack.c.bf16 %v683, %v682
      %689 = vset.pattern.permute.xlu0 0
      %690 = vperm.xlu0 %689, %v426
      %v691 = vpop.permute.xlu0 %690
      %694 = vset.pattern.permute.xlu0 0
      %695 = vperm.xlu0 %694, %v427
      %v696 = vpop.permute.xlu0 %695
      %699 = vset.pattern.permute.xlu0 0
      %700 = vperm.xlu0 %699, %v428
      %v701 = vpop.permute.xlu0 %700
      %704 = vset.pattern.permute.xlu0 0
      %705 = vperm.xlu0 %704, %v429
      %v706 = vpop.permute.xlu0 %705
      %709 = vset.pattern.permute.xlu0 0
      %710 = vperm.xlu0 %709, %v430
      %v711 = vpop.permute.xlu0 %710
      %714 = vset.pattern.permute.xlu0 0
      %715 = vperm.xlu0 %714, %v431
      %v716 = vpop.permute.xlu0 %715
      %719 = vset.pattern.permute.xlu0 0
      %720 = vperm.xlu0 %719, %v432
      %v721 = vpop.permute.xlu0 %720
      %724 = vset.pattern.permute.xlu0 0
      %725 = vperm.xlu0 %724, %v433
      %v726 = vpop.permute.xlu0 %725
      %v736 = vunpack.c.l.b16 %v418
      %v737 = vunpack.c.l.b16 %v419
      %v738 = vunpack.c.l.b16 %v420
      %v739 = vunpack.c.l.b16 %v421
      %v740 = vunpack.c.l.b16 %v422
      %v741 = vunpack.c.l.b16 %v423
      %v742 = vunpack.c.l.b16 %v424
      %v743 = vunpack.c.l.b16 %v425
      %v744 = vpack.c.b16 %v737, %v736
      %v745 = vpack.c.b16 %v739, %v738
      %v746 = vpack.c.b16 %v741, %v740
      %v747 = vpack.c.b16 %v743, %v742
      %vm748 = vcmask 523264
      %v750 = vsel %vm748, %v744, 0
      %v753 = vsel %vm748, %v745, 0
      %v756 = vsel %vm748, %v746, 0
      %v759 = vsel %vm748, %v747, 0
      %761 = vmatprep.subr.bf16.mxu0 0
      %762 = vmatpush1.bf16.msra.mxu0 %v684
      %763 = vmatprep.subr.bf16.mxu0 0
      %764 = vmatpush1.bf16.msra.mxu0 %v685
      %765 = vmatprep.subr.bf16.mxu0 0
      %766 = vmatpush1.bf16.msra.mxu0 %v686
      %767 = vmatprep.subr.bf16.mxu0 0
      %768 = vmatpush1.bf16.msra.mxu0 %v687
      %769 = vmatprep.subr.bf16.mxu0 0
      %770 = vmatpush1.bf16.msra.mxu0 0
      %771 = vmatprep.subr.bf16.mxu0 0
      %772 = vmatpush1.bf16.msra.mxu0 0
      %773 = vmatprep.subr.bf16.mxu0 0
      %774 = vmatpush1.bf16.msra.mxu0 0
      %775 = vmatprep.subr.bf16.mxu0 0
      %776 = vmatpush1.bf16.msra.mxu0 0
      %777 = vmatprep.subr.bf16.mxu0 0
      %778 = vmatpush1.bf16.msra.mxu0 0
      %779 = vmatprep.subr.bf16.mxu0 0
      %780 = vmatpush1.bf16.msra.mxu0 0
      %781 = vmatprep.subr.bf16.mxu0 0
      %782 = vmatpush1.bf16.msra.mxu0 0
      %783 = vmatprep.subr.bf16.mxu0 0
      %784 = vmatpush1.bf16.msra.mxu0 0
      %785 = vmatprep.subr.bf16.mxu0 0
      %786 = vmatpush1.bf16.msra.mxu0 0
      %787 = vmatprep.subr.bf16.mxu0 0
      %788 = vmatpush1.bf16.msra.mxu0 0
      %789 = vmatprep.subr.bf16.mxu0 0
      %790 = vmatpush1.bf16.msra.mxu0 0
      %791 = vmatprep.subr.bf16.mxu0 0
      %792 = vmatpush1.bf16.msra.mxu0 0
      %793 = vmatprep.mubr.bf16.mxu0 0
      %794 = vmatmul.mubr.bf16.gmra.mrb[0].mxu0 %v750
      %v795 = vpop.f32.mrb[0].mxu0
      %v796 = vadd.f32 %v691, %v795
      %v797 = vpop.f32.mrb[0].mxu0
      %v798 = vpop.f32.mrb[0].mxu0
      %v799 = vadd.f32 %v696, %v798
      %v800 = vpop.f32.mrb[0].mxu0
      %801 = vmatprep.mubr.bf16.mxu0 0
      %802 = vmatmul.mubr.bf16.gmra.mrb[0].mxu0 %v753
      %v803 = vpop.f32.mrb[0].mxu0
      %v804 = vadd.f32 %v701, %v803
      %v805 = vpop.f32.mrb[0].mxu0
      %v806 = vpop.f32.mrb[0].mxu0
      %v807 = vadd.f32 %v706, %v806
      %v808 = vpop.f32.mrb[0].mxu0
      %809 = vmatprep.mubr.bf16.mxu0 0
      %810 = vmatmul.mubr.bf16.gmra.mrb[0].mxu0 %v756
      %v811 = vpop.f32.mrb[0].mxu0
      %v812 = vadd.f32 %v711, %v811
      %v813 = vpop.f32.mrb[0].mxu0
      %v814 = vpop.f32.mrb[0].mxu0
      %v815 = vadd.f32 %v716, %v814
      %v816 = vpop.f32.mrb[0].mxu0
      %817 = vmatprep.mubr.bf16.mxu0 0
      %818 = vmatmul.mubr.bf16.gmra.mrb[0].mxu0 %v759
      %v819 = vpop.f32.mrb[0].mxu0
      %v820 = vadd.f32 %v721, %v819
      %v821 = vpop.f32.mrb[0].mxu0
      %v822 = vpop.f32.mrb[0].mxu0
      %v823 = vadd.f32 %v726, %v822
      %v824 = vpop.f32.mrb[0].mxu0
      %825 = vdwg.mxu0
      %v826 = vmax.f32 %v796, 0.0
      %v827 = vmax.f32 %v799, 0.0
      %v828 = vmax.f32 %v804, 0.0
      %v829 = vmax.f32 %v807, 0.0
      %v830 = vmax.f32 %v812, 0.0
      %v831 = vmax.f32 %v815, 0.0
      %v832 = vmax.f32 %v820, 0.0
      %v833 = vmax.f32 %v823, 0.0
      %v834 = vpack.c.bf16 %v827, %v826
      %v835 = vpack.c.bf16 %v829, %v828
      %v836 = vpack.c.bf16 %v831, %v830
      %v837 = vpack.c.bf16 %v833, %v832
      %839 = vset.pattern.permute.xlu0 0
      %840 = vperm.xlu0 %839, %v435
      %v841 = vpop.permute.xlu0 %840
      %v844 = vsel %vm748, %v434, 0
      %846 = vmatprep.subr.bf16.mxu0 0
      %847 = vmatpush1.bf16.msra.mxu0 %v834
      %848 = vmatprep.subr.bf16.mxu0 0
      %849 = vmatpush1.bf16.msra.mxu0 %v835
      %850 = vmatprep.subr.bf16.mxu0 0
      %851 = vmatpush1.bf16.msra.mxu0 %v836
      %852 = vmatprep.subr.bf16.mxu0 0
      %853 = vmatpush1.bf16.msra.mxu0 %v837
      %854 = vmatprep.subr.bf16.mxu0 0
      %855 = vmatpush1.bf16.msra.mxu0 0
      %856 = vmatprep.subr.bf16.mxu0 0
      %857 = vmatpush1.bf16.msra.mxu0 0
      %858 = vmatprep.subr.bf16.mxu0 0
      %859 = vmatpush1.bf16.msra.mxu0 0
      %860 = vmatprep.subr.bf16.mxu0 0
      %861 = vmatpush1.bf16.msra.mxu0 0
      %862 = vmatprep.subr.bf16.mxu0 0
      %863 = vmatpush1.bf16.msra.mxu0 0
      %864 = vmatprep.subr.bf16.mxu0 0
      %865 = vmatpush1.bf16.msra.mxu0 0
      %866 = vmatprep.subr.bf16.mxu0 0
      %867 = vmatpush1.bf16.msra.mxu0 0
      %868 = vmatprep.subr.bf16.mxu0 0
      %869 = vmatpush1.bf16.msra.mxu0 0
      %870 = vmatprep.subr.bf16.mxu0 0
      %871 = vmatpush1.bf16.msra.mxu0 0
      %872 = vmatprep.subr.bf16.mxu0 0
      %873 = vmatpush1.bf16.msra.mxu0 0
      %874 = vmatprep.subr.bf16.mxu0 0
      %875 = vmatpush1.bf16.msra.mxu0 0
      %876 = vmatprep.subr.bf16.mxu0 0
      %877 = vmatpush1.bf16.msra.mxu0 0
      %878 = vmatprep.mubr.bf16.mxu0 0
      %879 = vmatmul.mubr.bf16.gmra.mrb[0].mxu0 %v844
      %v880 = vpop.f32.mrb[0].mxu0
      %v881 = vadd.f32 %v841, %v880
      %v882 = vpop.f32.mrb[0].mxu0
      %v883 = vpop.f32.mrb[0].mxu0
      %v884 = vpop.f32.mrb[0].mxu0
      %885 = vdwg.mxu0
      %v886 = vxor.u32 %v881, 2147483648
      %v887 = vmul.f32 %v886, 1.442695
      %v888 = vpow.pop %v887
      %v889 = vadd.f32 %v888, 1.0
      %v890 = vrcp.pop %v889
      %v891 = vmul.f32 1.0, %v890
      %v892 = vmul.f32 %v891, 2.0
      %v893 = vsub.f32 %v892, 1.0
      %v895 = vrot.slane %v893, 6
      %v897 = vand.u32 2147483647, %v895
      %v898 = vand.u32 2147483647, %v893
      %v899 = vmin.f32 %v897, %v898
      %v900 = vmax.f32 %v897, %v898
      %v901 = vrcp.pop %v900
      %v902 = vmul.f32 %v899, %v901
      %v903 = vmul.f32 %v902, %v902
      %v904 = vmul.f32 0.002785687, %v903
      %v905 = vadd.f32 %v904, -0.015866
      %v906 = vmul.f32 %v905, %v903
      %v907 = vadd.f32 %v906, 0.04247222
      %v908 = vmul.f32 %v907, %v903
      %v909 = vadd.f32 %v908, -0.074975304
      %v910 = vmul.f32 %v909, %v903
      %v911 = vadd.f32 %v910, 0.1064488
      %v912 = vmul.f32 %v911, %v903
      %v913 = vadd.f32 %v912, -0.14207031
      %v914 = vmul.f32 %v913, %v903
      %v915 = vadd.f32 %v914, 0.19993454
      %v916 = vmul.f32 %v915, %v903
      %v917 = vadd.f32 %v916, -0.33333147
      %v918 = vmul.f32 %v917, %v903
      %v919 = vmul.f32 %v918, %v902
      %v920 = vadd.f32 %v919, %v902
      %vm921 = vcmp.gt.f32.partialorder %v898, %v897
      %v922 = vsub.f32 1.5707964, %v920
      %v923 = vsel %vm921, %v922, %v920
      %vm924 = vcmp.lt.f32.partialorder %v895, 0.0
      %v925 = vsub.f32 3.1415927, %v923
      %v926 = vsel %vm924, %v925, %v923
      %vm927 = vcmp.lt.s32.totalorder %v895, 0
      %v928 = vsel %vm927, 3.1415927, 0.0
      %vm929 = vcmp.eq.f32.partialorder %v893, 0.0
      %v930 = vsel %vm929, %v928, %v926
      %vm931 = vcmp.ne.f32.partialorder %v895, %v895
      %vm932 = vcmp.ne.f32.partialorder %v893, %v893
      %vm933 = vmor %vm931, %vm932
      %v934 = vsel %vm933, nan, %v930
      %vm935 = vcmp.lt.f32.partialorder %v895, 0.0
      %v936 = vsel %vm935, 2.3561945, 0.7853982
      %vm937 = vcmp.eq.s32.totalorder %v897, inf
      %vm938 = vcmp.eq.s32.totalorder %v898, inf
      %vm939 = vmand %vm937, %vm938
      %v940 = vsel %vm939, %v936, %v934
      %v941 = vand.u32 2147483647, %v940
      %v942 = vand.u32 %v893, 2147483648
      %v943 = vor.u32 %v941, %v942
      %s944 = sld [smem:[#allocation3 + $0x1]]
      %v945 = vstv %s944
      %v946 = vmul.f32 %v945, %v402
      %v947 = vmul.f32 %v945, %v403
      %v948 = vmul.f32 %v945, %v404
      %v949 = vmul.f32 %v945, %v405
      %v950 = vmul.f32 %v945, %v406
      %v951 = vmul.f32 %v945, %v407
      %v952 = vmul.f32 %v945, %v408
      %v953 = vmul.f32 %v945, %v409
      %955 = vset.pattern.permute.xlu0 0
      %956 = vperm.xlu0 %955, %v946
      %v957 = vpop.permute.xlu0 %956
      %960 = vset.pattern.permute.xlu0 0
      %961 = vperm.xlu0 %960, %v947
      %v962 = vpop.permute.xlu0 %961
      %965 = vset.pattern.permute.xlu0 0
      %966 = vperm.xlu0 %965, %v948
      %v967 = vpop.permute.xlu0 %966
      %970 = vset.pattern.permute.xlu0 0
      %971 = vperm.xlu0 %970, %v949
      %v972 = vpop.permute.xlu0 %971
      %975 = vset.pattern.permute.xlu0 0
      %976 = vperm.xlu0 %975, %v950
      %v977 = vpop.permute.xlu0 %976
      %980 = vset.pattern.permute.xlu0 0
      %981 = vperm.xlu0 %980, %v951
      %v982 = vpop.permute.xlu0 %981
      %985 = vset.pattern.permute.xlu0 0
      %986 = vperm.xlu0 %985, %v952
      %v987 = vpop.permute.xlu0 %986
      %990 = vset.pattern.permute.xlu0 0
      %991 = vperm.xlu0 %990, %v953
      %v992 = vpop.permute.xlu0 %991
      %v994 = vadd.f32 %v532, %v957
      %v995 = vadd.f32 %v537, %v962
      %v996 = vadd.f32 %v542, %v967
      %v997 = vadd.f32 %v547, %v972
      %v998 = vadd.f32 %v552, %v977
      %v999 = vadd.f32 %v557, %v982
      %v1000 = vadd.f32 %v562, %v987
      %v1001 = vadd.f32 %v567, %v992
      %v1002 = vadd.f32 %v994, %v631
      %v1003 = vadd.f32 %v995, %v636
      %v1004 = vadd.f32 %v996, %v641
      %v1005 = vadd.f32 %v997, %v646
      %v1006 = vadd.f32 %v998, %v651
      %v1007 = vadd.f32 %v999, %v656
      %v1008 = vadd.f32 %v1000, %v661
      %v1009 = vadd.f32 %v1001, %v666
      %v1010 = vmax.f32 %v1002, 0.0
      %v1011 = vmax.f32 %v1003, 0.0
      %v1012 = vmax.f32 %v1004, 0.0
      %v1013 = vmax.f32 %v1005, 0.0
      %v1014 = vmax.f32 %v1006, 0.0
      %v1015 = vmax.f32 %v1007, 0.0
      %v1016 = vmax.f32 %v1008, 0.0
      %v1017 = vmax.f32 %v1009, 0.0
      %v1018 = vpack.c.bf16 %v1011, %v1010
      %v1019 = vpack.c.bf16 %v1013, %v1012
      %v1020 = vpack.c.bf16 %v1015, %v1014
      %v1021 = vpack.c.bf16 %v1017, %v1016
      %1022 = vmatprep.subr.bf16.mxu0 0
      %1023 = vmatpush1.bf16.msra.mxu0 %v1018
      %1024 = vmatprep.subr.bf16.mxu0 0
      %1025 = vmatpush1.bf16.msra.mxu0 %v1019
      %1026 = vmatprep.subr.bf16.mxu0 0
      %1027 = vmatpush1.bf16.msra.mxu0 %v1020
      %1028 = vmatprep.subr.bf16.mxu0 0
      %1029 = vmatpush1.bf16.msra.mxu0 %v1021
      %1030 = vmatprep.subr.bf16.mxu0 0
      %1031 = vmatpush1.bf16.msra.mxu0 0
      %1032 = vmatprep.subr.bf16.mxu0 0
      %1033 = vmatpush1.bf16.msra.mxu0 0
      %1034 = vmatprep.subr.bf16.mxu0 0
      %1035 = vmatpush1.bf16.msra.mxu0 0
      %1036 = vmatprep.subr.bf16.mxu0 0
      %1037 = vmatpush1.bf16.msra.mxu0 0
      %1038 = vmatprep.subr.bf16.mxu0 0
      %1039 = vmatpush1.bf16.msra.mxu0 0
      %1040 = vmatprep.subr.bf16.mxu0 0
      %1041 = vmatpush1.bf16.msra.mxu0 0
      %1042 = vmatprep.subr.bf16.mxu0 0
      %1043 = vmatpush1.bf16.msra.mxu0 0
      %1044 = vmatprep.subr.bf16.mxu0 0
      %1045 = vmatpush1.bf16.msra.mxu0 0
      %1046 = vmatprep.subr.bf16.mxu0 0
      %1047 = vmatpush1.bf16.msra.mxu0 0
      %1048 = vmatprep.subr.bf16.mxu0 0
      %1049 = vmatpush1.bf16.msra.mxu0 0
      %1050 = vmatprep.subr.bf16.mxu0 0
      %1051 = vmatpush1.bf16.msra.mxu0 0
      %1052 = vmatprep.subr.bf16.mxu0 0
      %1053 = vmatpush1.bf16.msra.mxu0 0
      %1054 = vmatprep.mubr.bf16.mxu0 0
      %1055 = vmatmul.mubr.bf16.gmra.mrb[0].mxu0 %v750
      %v1056 = vpop.f32.mrb[0].mxu0
      %v1057 = vadd.f32 %v691, %v1056
      %v1058 = vpop.f32.mrb[0].mxu0
      %v1059 = vpop.f32.mrb[0].mxu0
      %v1060 = vadd.f32 %v696, %v1059
      %v1061 = vpop.f32.mrb[0].mxu0
      %1062 = vmatprep.mubr.bf16.mxu0 0
      %1063 = vmatmul.mubr.bf16.gmra.mrb[0].mxu0 %v753
      %v1064 = vpop.f32.mrb[0].mxu0
      %v1065 = vadd.f32 %v701, %v1064
      %v1066 = vpop.f32.mrb[0].mxu0
      %v1067 = vpop.f32.mrb[0].mxu0
      %v1068 = vadd.f32 %v706, %v1067
      %v1069 = vpop.f32.mrb[0].mxu0
      %1070 = vmatprep.mubr.bf16.mxu0 0
      %1071 = vmatmul.mubr.bf16.gmra.mrb[0].mxu0 %v756
      %v1072 = vpop.f32.mrb[0].mxu0
      %v1073 = vadd.f32 %v711, %v1072
      %v1074 = vpop.f32.mrb[0].mxu0
      %v1075 = vpop.f32.mrb[0].mxu0
      %v1076 = vadd.f32 %v716, %v1075
      %v1077 = vpop.f32.mrb[0].mxu0
      %1078 = vmatprep.mubr.bf16.mxu0 0
      %1079 = vmatmul.mubr.bf16.gmra.mrb[0].mxu0 %v759
      %v1080 = vpop.f32.mrb[0].mxu0
      %v1081 = vadd.f32 %v721, %v1080
      %v1082 = vpop.f32.mrb[0].mxu0
      %v1083 = vpop.f32.mrb[0].mxu0
      %v1084 = vadd.f32 %v726, %v1083
      %v1085 = vpop.f32.mrb[0].mxu0
      %1086 = vdwg.mxu0
      %v1087 = vmax.f32 %v1057, 0.0
      %v1088 = vmax.f32 %v1060, 0.0
      %v1089 = vmax.f32 %v1065, 0.0
      %v1090 = vmax.f32 %v1068, 0.0
      %v1091 = vmax.f32 %v1073, 0.0
      %v1092 = vmax.f32 %v1076, 0.0
      %v1093 = vmax.f32 %v1081, 0.0
      %v1094 = vmax.f32 %v1084, 0.0
      %v1095 = vpack.c.bf16 %v1088, %v1087
      %v1096 = vpack.c.bf16 %v1090, %v1089
      %v1097 = vpack.c.bf16 %v1092, %v1091
      %v1098 = vpack.c.bf16 %v1094, %v1093
      %1099 = vmatprep.subr.bf16.mxu0 0
      %1100 = vmatpush1.bf16.msra.mxu0 %v1095
      %1101 = vmatprep.subr.bf16.mxu0 0
      %1102 = vmatpush1.bf16.msra.mxu0 %v1096
      %1103 = vmatprep.subr.bf16.mxu0 0
      %1104 = vmatpush1.bf16.msra.mxu0 %v1097
      %1105 = vmatprep.subr.bf16.mxu0 0
      %1106 = vmatpush1.bf16.msra.mxu0 %v1098
      %1107 = vmatprep.subr.bf16.mxu0 0
      %1108 = vmatpush1.bf16.msra.mxu0 0
      %1109 = vmatprep.subr.bf16.mxu0 0
      %1110 = vmatpush1.bf16.msra.mxu0 0
      %1111 = vmatprep.subr.bf16.mxu0 0
      %1112 = vmatpush1.bf16.msra.mxu0 0
      %1113 = vmatprep.subr.bf16.mxu0 0
      %1114 = vmatpush1.bf16.msra.mxu0 0
      %1115 = vmatprep.subr.bf16.mxu0 0
      %1116 = vmatpush1.bf16.msra.mxu0 0
      %1117 = vmatprep.subr.bf16.mxu0 0
      %1118 = vmatpush1.bf16.msra.mxu0 0
      %1119 = vmatprep.subr.bf16.mxu0 0
      %1120 = vmatpush1.bf16.msra.mxu0 0
      %1121 = vmatprep.subr.bf16.mxu0 0
      %1122 = vmatpush1.bf16.msra.mxu0 0
      %1123 = vmatprep.subr.bf16.mxu0 0
      %1124 = vmatpush1.bf16.msra.mxu0 0
      %1125 = vmatprep.subr.bf16.mxu0 0
      %1126 = vmatpush1.bf16.msra.mxu0 0
      %1127 = vmatprep.subr.bf16.mxu0 0
      %1128 = vmatpush1.bf16.msra.mxu0 0
      %1129 = vmatprep.subr.bf16.mxu0 0
      %1130 = vmatpush1.bf16.msra.mxu0 0
      %1131 = vmatprep.mubr.bf16.mxu0 0
      %1132 = vmatmul.mubr.bf16.gmra.mrb[0].mxu0 %v844
      %v1133 = vpop.f32.mrb[0].mxu0
      %v1134 = vadd.f32 %v841, %v1133
      %v1135 = vpop.f32.mrb[0].mxu0
      %v1136 = vpop.f32.mrb[0].mxu0
      %v1137 = vpop.f32.mrb[0].mxu0
      %1138 = vdwg.mxu0
      %v1139 = vxor.u32 %v1134, 2147483648
      %v1140 = vmul.f32 %v1139, 1.442695
      %v1141 = vpow.pop %v1140
      %v1142 = vadd.f32 %v1141, 1.0
      %v1143 = vrcp.pop %v1142
      %v1144 = vmul.f32 1.0, %v1143
      %v1145 = vmul.f32 %v1144, 2.0
      %v1146 = vsub.f32 %v1145, 1.0
      %v1148 = vrot.slane %v1146, 6
      %v1150 = vand.u32 2147483647, %v1148
      %v1151 = vand.u32 2147483647, %v1146
      %v1152 = vmin.f32 %v1150, %v1151
      %v1153 = vmax.f32 %v1150, %v1151
      %v1154 = vrcp.pop %v1153
      %v1155 = vmul.f32 %v1152, %v1154
      %v1156 = vmul.f32 %v1155, %v1155
      %v1157 = vmul.f32 0.002785687, %v1156
      %v1158 = vadd.f32 %v1157, -0.015866
      %v1159 = vmul.f32 %v1158, %v1156
      %v1160 = vadd.f32 %v1159, 0.04247222
      %v1161 = vmul.f32 %v1160, %v1156
      %v1162 = vadd.f32 %v1161, -0.074975304
      %v1163 = vmul.f32 %v1162, %v1156
      %v1164 = vadd.f32 %v1163, 0.1064488
      %v1165 = vmul.f32 %v1164, %v1156
      %v1166 = vadd.f32 %v1165, -0.14207031
      %v1167 = vmul.f32 %v1166, %v1156
      %v1168 = vadd.f32 %v1167, 0.19993454
      %v1169 = vmul.f32 %v1168, %v1156
      %v1170 = vadd.f32 %v1169, -0.33333147
      %v1171 = vmul.f32 %v1170, %v1156
      %v1172 = vmul.f32 %v1171, %v1155
      %v1173 = vadd.f32 %v1172, %v1155
      %vm1174 = vcmp.gt.f32.partialorder %v1151, %v1150
      %v1175 = vsub.f32 1.5707964, %v1173
      %v1176 = vsel %vm1174, %v1175, %v1173
      %vm1177 = vcmp.lt.f32.partialorder %v1148, 0.0
      %v1178 = vsub.f32 3.1415927, %v1176
      %v1179 = vsel %vm1177, %v1178, %v1176
      %vm1180 = vcmp.lt.s32.totalorder %v1148, 0
      %v1181 = vsel %vm1180, 3.1415927, 0.0
      %vm1182 = vcmp.eq.f32.partialorder %v1146, 0.0
      %v1183 = vsel %vm1182, %v1181, %v1179
      %vm1184 = vcmp.ne.f32.partialorder %v1148, %v1148
      %vm1185 = vcmp.ne.f32.partialorder %v1146, %v1146
      %vm1186 = vmor %vm1184, %vm1185
      %v1187 = vsel %vm1186, nan, %v1183
      %vm1188 = vcmp.lt.f32.partialorder %v1148, 0.0
      %v1189 = vsel %vm1188, 2.3561945, 0.7853982
      %vm1190 = vcmp.eq.s32.totalorder %v1150, inf
      %vm1191 = vcmp.eq.s32.totalorder %v1151, inf
      %vm1192 = vmand %vm1190, %vm1191
      %v1193 = vsel %vm1192, %v1189, %v1187
      %v1194 = vand.u32 2147483647, %v1193
      %v1195 = vand.u32 %v1146, 2147483648
      %v1196 = vor.u32 %v1194, %v1195
      %s1197 = sld [smem:[#allocation3 + $0x2]]
      %v1198 = vstv %s1197
      %v1199 = vmul.f32 %v1198, %v402
      %v1200 = vmul.f32 %v1198, %v403
      %v1201 = vmul.f32 %v1198, %v404
      %v1202 = vmul.f32 %v1198, %v405
      %v1203 = vmul.f32 %v1198, %v406
      %v1204 = vmul.f32 %v1198, %v407
      %v1205 = vmul.f32 %v1198, %v408
      %v1206 = vmul.f32 %v1198, %v409
      %1208 = vset.pattern.permute.xlu0 0
      %1209 = vperm.xlu0 %1208, %v1199
      %v1210 = vpop.permute.xlu0 %1209
      %1213 = vset.pattern.permute.xlu0 0
      %1214 = vperm.xlu0 %1213, %v1200
      %v1215 = vpop.permute.xlu0 %1214
      %1218 = vset.pattern.permute.xlu0 0
      %1219 = vperm.xlu0 %1218, %v1201
      %v1220 = vpop.permute.xlu0 %1219
      %1223 = vset.pattern.permute.xlu0 0
      %1224 = vperm.xlu0 %1223, %v1202
      %v1225 = vpop.permute.xlu0 %1224
      %1228 = vset.pattern.permute.xlu0 0
      %1229 = vperm.xlu0 %1228, %v1203
      %v1230 = vpop.permute.xlu0 %1229
      %1233 = vset.pattern.permute.xlu0 0
      %1234 = vperm.xlu0 %1233, %v1204
      %v1235 = vpop.permute.xlu0 %1234
      %1238 = vset.pattern.permute.xlu0 0
      %1239 = vperm.xlu0 %1238, %v1205
      %v1240 = vpop.permute.xlu0 %1239
      %1243 = vset.pattern.permute.xlu0 0
      %1244 = vperm.xlu0 %1243, %v1206
      %v1245 = vpop.permute.xlu0 %1244
      %v1247 = vadd.f32 %v532, %v1210
      %v1248 = vadd.f32 %v537, %v1215
      %v1249 = vadd.f32 %v542, %v1220
      %v1250 = vadd.f32 %v547, %v1225
      %v1251 = vadd.f32 %v552, %v1230
      %v1252 = vadd.f32 %v557, %v1235
      %v1253 = vadd.f32 %v562, %v1240
      %v1254 = vadd.f32 %v567, %v1245
      %v1255 = vadd.f32 %v1247, %v631
      %v1256 = vadd.f32 %v1248, %v636
      %v1257 = vadd.f32 %v1249, %v641
      %v1258 = vadd.f32 %v1250, %v646
      %v1259 = vadd.f32 %v1251, %v651
      %v1260 = vadd.f32 %v1252, %v656
      %v1261 = vadd.f32 %v1253, %v661
      %v1262 = vadd.f32 %v1254, %v666
      %v1263 = vmax.f32 %v1255, 0.0
      %v1264 = vmax.f32 %v1256, 0.0
      %v1265 = vmax.f32 %v1257, 0.0
      %v1266 = vmax.f32 %v1258, 0.0
      %v1267 = vmax.f32 %v1259, 0.0
      %v1268 = vmax.f32 %v1260, 0.0
      %v1269 = vmax.f32 %v1261, 0.0
      %v1270 = vmax.f32 %v1262, 0.0
      %v1271 = vpack.c.bf16 %v1264, %v1263
      %v1272 = vpack.c.bf16 %v1266, %v1265
      %v1273 = vpack.c.bf16 %v1268, %v1267
      %v1274 = vpack.c.bf16 %v1270, %v1269
      %1275 = vmatprep.subr.bf16.mxu0 0
      %1276 = vmatpush1.bf16.msra.mxu0 %v1271
      %1277 = vmatprep.subr.bf16.mxu0 0
      %1278 = vmatpush1.bf16.msra.mxu0 %v1272
      %1279 = vmatprep.subr.bf16.mxu0 0
      %1280 = vmatpush1.bf16.msra.mxu0 %v1273
      %1281 = vmatprep.subr.bf16.mxu0 0
      %1282 = vmatpush1.bf16.msra.mxu0 %v1274
      %1283 = vmatprep.subr.bf16.mxu0 0
      %1284 = vmatpush1.bf16.msra.mxu0 0
      %1285 = vmatprep.subr.bf16.mxu0 0
      %1286 = vmatpush1.bf16.msra.mxu0 0
      %1287 = vmatprep.subr.bf16.mxu0 0
      %1288 = vmatpush1.bf16.msra.mxu0 0
      %1289 = vmatprep.subr.bf16.mxu0 0
      %1290 = vmatpush1.bf16.msra.mxu0 0
      %1291 = vmatprep.subr.bf16.mxu0 0
      %1292 = vmatpush1.bf16.msra.mxu0 0
      %1293 = vmatprep.subr.bf16.mxu0 0
      %1294 = vmatpush1.bf16.msra.mxu0 0
      %1295 = vmatprep.subr.bf16.mxu0 0
      %1296 = vmatpush1.bf16.msra.mxu0 0
      %1297 = vmatprep.subr.bf16.mxu0 0
      %1298 = vmatpush1.bf16.msra.mxu0 0
      %1299 = vmatprep.subr.bf16.mxu0 0
      %1300 = vmatpush1.bf16.msra.mxu0 0
      %1301 = vmatprep.subr.bf16.mxu0 0
      %1302 = vmatpush1.bf16.msra.mxu0 0
      %1303 = vmatprep.subr.bf16.mxu0 0
      %1304 = vmatpush1.bf16.msra.mxu0 0
      %1305 = vmatprep.subr.bf16.mxu0 0
      %1306 = vmatpush1.bf16.msra.mxu0 0
      %1307 = vmatprep.mubr.bf16.mxu0 0
      %1308 = vmatmul.mubr.bf16.gmra.mrb[0].mxu0 %v750
      %v1309 = vpop.f32.mrb[0].mxu0
      %v1310 = vadd.f32 %v691, %v1309
      %v1311 = vpop.f32.mrb[0].mxu0
      %v1312 = vpop.f32.mrb[0].mxu0
      %v1313 = vadd.f32 %v696, %v1312
      %v1314 = vpop.f32.mrb[0].mxu0
      %1315 = vmatprep.mubr.bf16.mxu0 0
      %1316 = vmatmul.mubr.bf16.gmra.mrb[0].mxu0 %v753
      %v1317 = vpop.f32.mrb[0].mxu0
      %v1318 = vadd.f32 %v701, %v1317
      %v1319 = vpop.f32.mrb[0].mxu0
      %v1320 = vpop.f32.mrb[0].mxu0
      %v1321 = vadd.f32 %v706, %v1320
      %v1322 = vpop.f32.mrb[0].mxu0
      %1323 = vmatprep.mubr.bf16.mxu0 0
      %1324 = vmatmul.mubr.bf16.gmra.mrb[0].mxu0 %v756
      %v1325 = vpop.f32.mrb[0].mxu0
      %v1326 = vadd.f32 %v711, %v1325
      %v1327 = vpop.f32.mrb[0].mxu0
      %v1328 = vpop.f32.mrb[0].mxu0
      %v1329 = vadd.f32 %v716, %v1328
      %v1330 = vpop.f32.mrb[0].mxu0
      %1331 = vmatprep.mubr.bf16.mxu0 0
      %1332 = vmatmul.mubr.bf16.gmra.mrb[0].mxu0 %v759
      %v1333 = vpop.f32.mrb[0].mxu0
      %v1334 = vadd.f32 %v721, %v1333
      %v1335 = vpop.f32.mrb[0].mxu0
      %v1336 = vpop.f32.mrb[0].mxu0
      %v1337 = vadd.f32 %v726, %v1336
      %v1338 = vpop.f32.mrb[0].mxu0
      %1339 = vdwg.mxu0
      %v1340 = vmax.f32 %v1310, 0.0
      %v1341 = vmax.f32 %v1313, 0.0
      %v1342 = vmax.f32 %v1318, 0.0
      %v1343 = vmax.f32 %v1321, 0.0
      %v1344 = vmax.f32 %v1326, 0.0
      %v1345 = vmax.f32 %v1329, 0.0
      %v1346 = vmax.f32 %v1334, 0.0
      %v1347 = vmax.f32 %v1337, 0.0
      %v1348 = vpack.c.bf16 %v1341, %v1340
      %v1349 = vpack.c.bf16 %v1343, %v1342
      %v1350 = vpack.c.bf16 %v1345, %v1344
      %v1351 = vpack.c.bf16 %v1347, %v1346
      %1352 = vmatprep.subr.bf16.mxu0 0
      %1353 = vmatpush1.bf16.msra.mxu0 %v1348
      %1354 = vmatprep.subr.bf16.mxu0 0
      %1355 = vmatpush1.bf16.msra.mxu0 %v1349
      %1356 = vmatprep.subr.bf16.mxu0 0
      %1357 = vmatpush1.bf16.msra.mxu0 %v1350
      %1358 = vmatprep.subr.bf16.mxu0 0
      %1359 = vmatpush1.bf16.msra.mxu0 %v1351
      %1360 = vmatprep.subr.bf16.mxu0 0
      %1361 = vmatpush1.bf16.msra.mxu0 0
      %1362 = vmatprep.subr.bf16.mxu0 0
      %1363 = vmatpush1.bf16.msra.mxu0 0
      %1364 = vmatprep.subr.bf16.mxu0 0
      %1365 = vmatpush1.bf16.msra.mxu0 0
      %1366 = vmatprep.subr.bf16.mxu0 0
      %1367 = vmatpush1.bf16.msra.mxu0 0
      %1368 = vmatprep.subr.bf16.mxu0 0
      %1369 = vmatpush1.bf16.msra.mxu0 0
      %1370 = vmatprep.subr.bf16.mxu0 0
      %1371 = vmatpush1.bf16.msra.mxu0 0
      %1372 = vmatprep.subr.bf16.mxu0 0
      %1373 = vmatpush1.bf16.msra.mxu0 0
      %1374 = vmatprep.subr.bf16.mxu0 0
      %1375 = vmatpush1.bf16.msra.mxu0 0
      %1376 = vmatprep.subr.bf16.mxu0 0
      %1377 = vmatpush1.bf16.msra.mxu0 0
      %1378 = vmatprep.subr.bf16.mxu0 0
      %1379 = vmatpush1.bf16.msra.mxu0 0
      %1380 = vmatprep.subr.bf16.mxu0 0
      %1381 = vmatpush1.bf16.msra.mxu0 0
      %1382 = vmatprep.subr.bf16.mxu0 0
      %1383 = vmatpush1.bf16.msra.mxu0 0
      %1384 = vmatprep.mubr.bf16.mxu0 0
      %1385 = vmatmul.mubr.bf16.gmra.mrb[0].mxu0 %v844
      %v1386 = vpop.f32.mrb[0].mxu0
      %v1387 = vadd.f32 %v841, %v1386
      %v1388 = vpop.f32.mrb[0].mxu0
      %v1389 = vpop.f32.mrb[0].mxu0
      %v1390 = vpop.f32.mrb[0].mxu0
      %1391 = vdwg.mxu0
      %v1392 = vxor.u32 %v1387, 2147483648
      %v1393 = vmul.f32 %v1392, 1.442695
      %v1394 = vpow.pop %v1393
      %v1395 = vadd.f32 %v1394, 1.0
      %v1396 = vrcp.pop %v1395
      %v1397 = vmul.f32 1.0, %v1396
      %v1398 = vmul.f32 %v1397, 2.0
      %v1399 = vsub.f32 %v1398, 1.0
      %v1401 = vrot.slane %v1399, 6
      %v1403 = vand.u32 2147483647, %v1401
      %v1404 = vand.u32 2147483647, %v1399
      %v1405 = vmin.f32 %v1403, %v1404
      %v1406 = vmax.f32 %v1403, %v1404
      %v1407 = vrcp.pop %v1406
      %v1408 = vmul.f32 %v1405, %v1407
      %v1409 = vmul.f32 %v1408, %v1408
      %v1410 = vmul.f32 0.002785687, %v1409
      %v1411 = vadd.f32 %v1410, -0.015866
      %v1412 = vmul.f32 %v1411, %v1409
      %v1413 = vadd.f32 %v1412, 0.04247222
      %v1414 = vmul.f32 %v1413, %v1409
      %v1415 = vadd.f32 %v1414, -0.074975304
      %v1416 = vmul.f32 %v1415, %v1409
      %v1417 = vadd.f32 %v1416, 0.1064488
      %v1418 = vmul.f32 %v1417, %v1409
      %v1419 = vadd.f32 %v1418, -0.14207031
      %v1420 = vmul.f32 %v1419, %v1409
      %v1421 = vadd.f32 %v1420, 0.19993454
      %v1422 = vmul.f32 %v1421, %v1409
      %v1423 = vadd.f32 %v1422, -0.33333147
      %v1424 = vmul.f32 %v1423, %v1409
      %v1425 = vmul.f32 %v1424, %v1408
      %v1426 = vadd.f32 %v1425, %v1408
      %vm1427 = vcmp.gt.f32.partialorder %v1404, %v1403
      %v1428 = vsub.f32 1.5707964, %v1426
      %v1429 = vsel %vm1427, %v1428, %v1426
      %vm1430 = vcmp.lt.f32.partialorder %v1401, 0.0
      %v1431 = vsub.f32 3.1415927, %v1429
      %v1432 = vsel %vm1430, %v1431, %v1429
      %vm1433 = vcmp.lt.s32.totalorder %v1401, 0
      %v1434 = vsel %vm1433, 3.1415927, 0.0
      %vm1435 = vcmp.eq.f32.partialorder %v1399, 0.0
      %v1436 = vsel %vm1435, %v1434, %v1432
      %vm1437 = vcmp.ne.f32.partialorder %v1401, %v1401
      %vm1438 = vcmp.ne.f32.partialorder %v1399, %v1399
      %vm1439 = vmor %vm1437, %vm1438
      %v1440 = vsel %vm1439, nan, %v1436
      %vm1441 = vcmp.lt.f32.partialorder %v1401, 0.0
      %v1442 = vsel %vm1441, 2.3561945, 0.7853982
      %vm1443 = vcmp.eq.s32.totalorder %v1403, inf
      %vm1444 = vcmp.eq.s32.totalorder %v1404, inf
      %vm1445 = vmand %vm1443, %vm1444
      %v1446 = vsel %vm1445, %v1442, %v1440
      %v1447 = vand.u32 2147483647, %v1446
      %v1448 = vand.u32 %v1399, 2147483648
      %v1449 = vor.u32 %v1447, %v1448
      %v1451 = vrot.slane %v1144, 7
      %v1454 = vrot.slane %v1397, 6
      %v1457 = vrot.slane %v891, 6
      %v1459 = vrot.slane %v1144, 5
      %v1461 = vrot.slane %v1397, 4
      %vm1463 = vcmask 1040384
      %v1464 = vsel %vm1463, %v891, %v1451
      %vm1465 = vcmask 1041408
      %v1466 = vsel %vm1465, %v1464, %v1454
      %v1467 = vsel %vm461, %v1466, %v1457
      %vm1468 = vcmask 1043456
      %v1469 = vsel %vm1468, %v1467, %v1459
      %vm1470 = vcmask 1044480
      %v1471 = vsel %vm1470, %v1469, %v1461
      %1472 = vst [vmem:[%s383] sm:$0x3f] %v1471
      %v1474 = vrot.slane %v943, 4
      %v1477 = vrot.slane %v1196, 3
      %v1480 = vrot.slane %v1449, 2
      %v1482 = vrot.slane %v943, 2
      %v1484 = vrot.slane %v1196, 1
      %v1486 = vsel %vm1463, %v1474, %v1477
      %v1487 = vsel %vm1465, %v1486, %v1480
      %v1488 = vsel %vm461, %v1487, %v1482
      %v1489 = vsel %vm1468, %v1488, %v1484
      %v1490 = vsel %vm1470, %v1489, %v1449
      %1491 = vst [vmem:[%s391] sm:$0x3f] %v1490
      %p1492 = scmp.lt.s32.totalorder %s32, 1
      %s1493 = scalar_select %p1492, %s32, 1
      %p1494 = scmp.lt.s32.totalorder %s33, 1
      %s1495 = scalar_select %p1494, %s33, 1
      %s1496 = smul.addr %s1493, 2
      %s1497 = sadd.s32 %s1495, %s1496
      %s1498 = smul.addr %s1497, 8
      %s1499 = scalar_lea.vmem %s9, %s1498
      %p1500 = scmp.lt.s32.totalorder %s32, 1
      %s1501 = scalar_select %p1500, %s32, 1
      %p1502 = scmp.lt.s32.totalorder %s33, 1
      %s1503 = scalar_select %p1502, %s33, 1
      %s1504 = smul.addr %s1501, 2
      %s1505 = sadd.s32 %s1503, %s1504
      %s1506 = smul.addr %s1505, 8
      %s1507 = scalar_lea.vmem %s10, %s1506
      // Predicated region
      $region53: #{tpu_custom_call.1} parent=51 // pred_check
        %p1508 = pneg %p235
      $region54: #{tpu_custom_call.1} parent=51 // pred_check_branch
        %1510 = sbr.rel (%p1508) target = $region56
      $region55: #{tpu_custom_call.1} parent=51 // pred_region
        _
      $region56: #{tpu_custom_call.1} parent=51 // pred_fallthru
        _
      // Predicated region
      $region57: #{tpu_custom_call.1} parent=51 // pred_check
        %p1511 = pneg %p263
      $region58: #{tpu_custom_call.1} parent=51 // pred_check_branch
        %1513 = sbr.rel (%p1511) target = $region60
      $region59: #{tpu_custom_call.1} parent=51 // pred_region
        _
      $region60: #{tpu_custom_call.1} parent=51 // pred_fallthru
        _
    $region52: #{tpu_custom_call.1} parent=5 // pred_fallthru
      _
    %p1514 = scmp.le.s32.totalorder 2, %s23
    // Predicated region
    $region61: #{tpu_custom_call.1} parent=5 // pred_check
      %p1515 = pneg %p1514
    $region62: #{tpu_custom_call.1} parent=5 // pred_check_branch
      %1517 = sbr.rel (%p1515) target = $region64
    $region63: #{tpu_custom_call.1} parent=5 // pred_region
      %s1518 = ssub.s32 %s23, 2
      // Predicated region
      $region65: #{tpu_custom_call.1} parent=63 // pred_check
        %p1519 = pneg %p241
      $region66: #{tpu_custom_call.1} parent=63 // pred_check_branch
        %1521 = sbr.rel (%p1519) target = $region68
      $region67: #{tpu_custom_call.1} parent=63 // pred_region
        %p1522 = scmp.lt.s32.totalorder %s34, 1
        %s1523 = scalar_select %p1522, %s34, 1
        %p1524 = scmp.lt.s32.totalorder %s35, 1
        %s1525 = scalar_select %p1524, %s35, 1
        %s1526 = smul.addr %s1523, 2
        %s1527 = sadd.s32 %s1525, %s1526
        %s1528 = smul.addr %s1527, 8
        %s1529 = scalar_lea.vmem %s9, %s1528
      $region68: #{tpu_custom_call.1} parent=63 // pred_fallthru
        _
      // Predicated region
      $region69: #{tpu_custom_call.1} parent=63 // pred_check
        %p1530 = pneg %p269
      $region70: #{tpu_custom_call.1} parent=63 // pred_check_branch
        %1532 = sbr.rel (%p1530) target = $region72
      $region71: #{tpu_custom_call.1} parent=63 // pred_region
        %p1533 = scmp.lt.s32.totalorder %s34, 1
        %s1534 = scalar_select %p1533, %s34, 1
        %p1535 = scmp.lt.s32.totalorder %s35, 1
        %s1536 = scalar_select %p1535, %s35, 1
        %s1537 = smul.addr %s1534, 2
        %s1538 = sadd.s32 %s1536, %s1537
        %s1539 = smul.addr %s1538, 8
        %s1540 = scalar_lea.vmem %s10, %s1539
      $region72: #{tpu_custom_call.1} parent=63 // pred_fallthru
        _
    $region64: #{tpu_custom_call.1} parent=5 // pred_fallthru
      _
  $region6: #{tpu_custom_call.1} parent=0 // loop_footer
    %s27 = sadd.s32 1, %s23
  $region7: #{tpu_custom_call.1} parent=0 // loop_footer_branch
    %22 = sbr.rel target = $region3
  $region8: #{tpu_custom_call.1} parent=0 // loop_exit
    _

</llo_original>
